<compile_context>
chip_gen: v5e
topology: v5e:2x2
jax: 0.10.0
libtpu: 0.0.40
codegen_flags: <defaults>
</compile_context>

<pallas_src>
import jax
import jax.numpy as jnp
from jax.experimental import pallas as pl
from jax.experimental.pallas import tpu as pltpu

EPS = 1e-5

_VMEM_LIMIT = None


def _vmem_limit_bytes():
    """Per-generation scoped-VMEM limit (v7x: 64 MiB physical -> 48 MiB; v5e/v6e: 96 MiB)."""
    global _VMEM_LIMIT
    if _VMEM_LIMIT is None:
        cap = None
        try:
            cap = getattr(pltpu.get_tpu_info(), "vmem_capacity_bytes", None)
        except Exception:
            cap = None
        if not cap:
            cap = 64 * 1024 * 1024  # conservative default (v7x)
        _VMEM_LIMIT = int(min(max(cap - 16 * 1024 * 1024, 32 * 1024 * 1024),
                              96 * 1024 * 1024))
    return _VMEM_LIMIT


# ---------------------------------------------------------------------------
# Pallas kernels
# ---------------------------------------------------------------------------
def _conv_bn_relu_kernel(x_ref, w_ref, g_ref, bt_ref, o_ref):
    """Fused im2col-matmul conv (bf16 MXU, f32 acc) + BatchNorm(batch stats) + ReLU.

    Grid = (n_tiles, k_tiles). The output block is resident across the K axis and is
    used directly as the f32 accumulator (no scratch). Conv bias is omitted: it is
    exactly cancelled by the BN mean subtraction.
    """
    k = pl.program_id(1)

    @pl.when(k == 0)
    def _():
        o_ref[...] = jnp.zeros_like(o_ref)

    o_ref[...] += jnp.dot(x_ref[...], w_ref[...],
                          preferred_element_type=jnp.float32)

    @pl.when(k == pl.num_programs(1) - 1)
    def _():
        y = o_ref[...]
        # Single-pass BN stats over rows (N*H*W) of this channel tile.
        mean = jnp.mean(y, axis=0, keepdims=True)
        var = jnp.mean(y * y, axis=0, keepdims=True) - mean * mean
        yhat = (y - mean) * jax.lax.rsqrt(var + EPS)
        o_ref[...] = jnp.maximum(yhat * g_ref[...] + bt_ref[...], 0.0)


def conv_bn_relu_matmul(patches_bf16, w_bf16, gamma, beta):
    M, K = patches_bf16.shape
    _, N = w_bf16.shape

    # K tiling: aim for >=2 pipelined K steps on the large layers so the weight DMA
    # overlaps MXU work, while keeping weight blocks small (critical on v7x).
    if K % 1152 == 0 and K >= 2304:
        tk = 1152
    elif K % 576 == 0 and K >= 1152:
        tk = 576
    else:
        tk = K
    # Output-channel tiling: parallel axis (megacore) + smaller resident accumulator.
    tn = 256 if (N % 256 == 0 and N > 256) else N

    grid = (N // tn, K // tk)
    return pl.pallas_call(
        _conv_bn_relu_kernel,
        out_shape=jax.ShapeDtypeStruct((M, N), jnp.float32),
        grid_spec=pltpu.PrefetchScalarGridSpec(
            num_scalar_prefetch=0,
            grid=grid,
            in_specs=[
                pl.BlockSpec((M, tk), lambda j, k: (0, k)),
                pl.BlockSpec((tk, tn), lambda j, k: (k, j)),
                pl.BlockSpec((1, tn), lambda j, k: (0, j)),
                pl.BlockSpec((1, tn), lambda j, k: (0, j)),
            ],
            out_specs=pl.BlockSpec((M, tn), lambda j, k: (0, j)),
        ),
        compiler_params=pltpu.CompilerParams(
            dimension_semantics=("parallel", "arbitrary"),
            vmem_limit_bytes=_vmem_limit_bytes(),
        ),
    )(patches_bf16, w_bf16, gamma.reshape(1, N), beta.reshape(1, N))


def _matmul_bias_kernel(x_ref, w_ref, b_ref, o_ref):
    o_ref[...] = jnp.dot(x_ref[...], w_ref[...],
                         preferred_element_type=jnp.float32) + b_ref[...]


def matmul_bias(x, w_bf16, b):
    """x @ w + b with bf16 operands, f32 output, tiled over output channels."""
    M, K = x.shape
    _, N = w_bf16.shape
    tn = 256 if (N % 256 == 0 and N > 256) else N
    # TODO(synk): also tile M/K once M = N*H*W grows beyond VMEM (real resolutions).
    return pl.pallas_call(
        _matmul_bias_kernel,
        out_shape=jax.ShapeDtypeStruct((M, N), jnp.float32),
        grid_spec=pltpu.PrefetchScalarGridSpec(
            num_scalar_prefetch=0,
            grid=(N // tn,),
            in_specs=[
                pl.BlockSpec((M, K), lambda j: (0, 0)),
                pl.BlockSpec((K, tn), lambda j: (0, j)),
                pl.BlockSpec((1, tn), lambda j: (0, j)),
            ],
            out_specs=pl.BlockSpec((M, tn), lambda j: (0, j)),
        ),
        compiler_params=pltpu.CompilerParams(
            dimension_semantics=("parallel",),
            vmem_limit_bytes=_vmem_limit_bytes(),
        ),
    )(x.astype(jnp.bfloat16), w_bf16, b.reshape(1, N))


def _maxpool_kernel(x_ref, o_ref):
    """2x2 max pool. Input block (rows, 2, W/2, 2C): dim 1 = H-pair, lane halves = W-pair."""
    a = x_ref[:, 0]                      # even-H rows: (rows, W/2, 2C)
    b = x_ref[:, 1]                      # odd-H rows
    m = jnp.maximum(a, b)
    c = o_ref.shape[-1]
    o_ref[...] = jnp.maximum(m[..., :c], m[..., c:])


def maxpool2x2(x):  # [N, H, W, C] -> [N, H//2, W//2, C]
    N, H, W, C = x.shape
    # Free (contiguous) reshape: rows pair consecutive H lines, lanes pair consecutive W
    # pixels. No strided HBM gathers.
    xr = x.reshape(N * H // 2, 2, W // 2, 2 * C)
    out = pl.pallas_call(
        _maxpool_kernel,
        out_shape=jax.ShapeDtypeStruct((N * H // 2, W // 2, C), x.dtype),
        compiler_params=pltpu.CompilerParams(
            vmem_limit_bytes=_vmem_limit_bytes()),
    )(xr)
    return out.reshape(N, H // 2, W // 2, C)


# ---------------------------------------------------------------------------
# JAX glue (layout plumbing only)
# ---------------------------------------------------------------------------
def im2col_3x3(x):  # x: [N, H, W, C] -> [N*H*W, 9*C] bf16, patch order (kh, kw, c)
    # TODO(synk): move this halo/patch construction inside the conv kernel.
    N, H, W, C = x.shape
    xb = x.astype(jnp.bfloat16)
    xp = jnp.pad(xb, ((0, 0), (1, 1), (1, 1), (0, 0)))
    cols = [xp[:, i:i + H, j:j + W, :] for i in range(3) for j in range(3)]
    patches = jnp.concatenate(cols, axis=-1)
    return patches.reshape(N * H * W, 9 * C)


def conv_block(x, params):
    """ConvBlock: (Conv3x3 + BN + ReLU) x 2."""
    N, H, W, _ = x.shape
    w1, g1, bt1, w2, g2, bt2 = params
    cout = w1.shape[1]
    y = conv_bn_relu_matmul(im2col_3x3(x), w1, g1, bt1).reshape(N, H, W, cout)
    y = conv_bn_relu_matmul(im2col_3x3(y), w2, g2, bt2).reshape(N, H, W, cout)
    return y


def upsample2x(x, w, b):
    """ConvTranspose2d(kernel=2, stride=2). w: [Cin, 4*Cout] bf16 (a,b,cout order)."""
    N, H, W, Cin = x.shape
    Cout = w.shape[1] // 4
    y = matmul_bias(x.reshape(N * H * W, Cin), w, b)
    y = y.reshape(N, H, W, 2, 2, Cout).transpose(0, 1, 3, 2, 4, 5)
    return y.reshape(N, 2 * H, 2 * W, Cout)


# ---------------------------------------------------------------------------
# Parameter init (deterministic, synthetic)
# ---------------------------------------------------------------------------
def init_params(key, in_channels=3, out_channels=3):
    keys = iter(jax.random.split(key, 64))

    def conv_block_params(cin, cout):
        # Conv biases are omitted: with a following BatchNorm they cancel exactly.
        w1 = jax.random.normal(next(keys), (3, 3, cin, cout), jnp.float32)
        w1 = w1 * (2.0 / (9 * cin)) ** 0.5
        w2 = jax.random.normal(next(keys), (3, 3, cout, cout), jnp.float32)
        w2 = w2 * (2.0 / (9 * cout)) ** 0.5
        return (w1.reshape(9 * cin, cout).astype(jnp.bfloat16),
                jnp.ones((cout,), jnp.float32),      # bn1 gamma
                jnp.zeros((cout,), jnp.float32),     # bn1 beta
                w2.reshape(9 * cout, cout).astype(jnp.bfloat16),
                jnp.ones((cout,), jnp.float32),      # bn2 gamma
                jnp.zeros((cout,), jnp.float32))     # bn2 beta

    def up_params(cin, cout):
        w = jax.random.normal(next(keys), (cin, 2, 2, cout), jnp.float32)
        w = w * (1.0 / cin) ** 0.5
        b = 0.01 * jax.random.normal(next(keys), (cout,), jnp.float32)
        return (w.reshape(cin, 4 * cout).astype(jnp.bfloat16), jnp.tile(b, 4))

    p = {}
    p["enc1"] = conv_block_params(in_channels, 64)
    p["enc2"] = conv_block_params(64, 128)
    p["enc3"] = conv_block_params(128, 256)
    p["enc4"] = conv_block_params(256, 512)
    p["bottleneck"] = conv_block_params(512, 1024)
    p["up4"] = up_params(1024, 512)
    p["conv4"] = conv_block_params(1024, 512)
    p["up3"] = up_params(512, 256)
    p["conv3"] = conv_block_params(512, 256)
    p["up2"] = up_params(256, 128)
    p["conv2"] = conv_block_params(256, 128)
    p["up1"] = up_params(128, 64)
    p["conv1"] = conv_block_params(128, 64)
    wf = jax.random.normal(next(keys), (64, out_channels), jnp.float32) * (1.0 / 64) ** 0.5
    bf = 0.01 * jax.random.normal(next(keys), (out_channels,), jnp.float32)
    p["final"] = (wf.astype(jnp.bfloat16), bf)
    return p


# ---------------------------------------------------------------------------
# Forward pass (mirrors UnetPlusPlus.forward)
# ---------------------------------------------------------------------------
def unetpp_forward(x_nchw, params):
    x = jnp.transpose(x_nchw, (0, 2, 3, 1))  # NCHW -> NHWC

    enc1 = conv_block(x, params["enc1"])
    enc2 = conv_block(maxpool2x2(enc1), params["enc2"])
    enc3 = conv_block(maxpool2x2(enc2), params["enc3"])
    enc4 = conv_block(maxpool2x2(enc3), params["enc4"])
    bottleneck = conv_block(maxpool2x2(enc4), params["bottleneck"])

    dec4 = upsample2x(bottleneck, *params["up4"])
    dec4 = conv_block(jnp.concatenate([dec4, enc4], axis=-1), params["conv4"])
    dec3 = upsample2x(dec4, *params["up3"])
    dec3 = conv_block(jnp.concatenate([dec3, enc3], axis=-1), params["conv3"])
    dec2 = upsample2x(dec3, *params["up2"])
    dec2 = conv_block(jnp.concatenate([dec2, enc2], axis=-1), params["conv2"])
    dec1 = upsample2x(dec2, *params["up1"])
    dec1 = conv_block(jnp.concatenate([dec1, enc1], axis=-1), params["conv1"])

    N, H, W, C = dec1.shape
    wf, bf = params["final"]
    out = matmul_bias(dec1.reshape(N * H * W, C), wf, bf)
    out = out.reshape(N, H, W, -1)
    return jnp.transpose(out, (0, 3, 1, 2))  # NHWC -> NCHW


if __name__ == "__main__":
    key = jax.random.PRNGKey(0)
    kx, kp = jax.random.split(key)
    x = jax.random.normal(kx, (2, 3, 16, 16), jnp.float32)  # NCHW like PyTorch
    params = init_params(kp, in_channels=3, out_channels=3)

    out = unetpp_forward(x, params)
    out = jax.block_until_ready(out)
    assert out.shape == (2, 3, 16, 16), out.shape
    assert out.dtype == jnp.float32
    print("KERNEL_OK")
</pallas_src>

<mosaic_0001>
module attributes {stable_mosaic.version = 11 : i64} {
  func.func @_conv_bn_relu_kernel(%arg0: i32, %arg1: i32, %arg2: memref<512x27xbf16, #tpu.memory_space<vmem>>, %arg3: memref<27x64xbf16, #tpu.memory_space<vmem>>, %arg4: memref<1x64xf32, #tpu.memory_space<vmem>>, %arg5: memref<1x64xf32, #tpu.memory_space<vmem>>, %arg6: memref<512x64xf32, #tpu.memory_space<vmem>>) attributes {dimension_semantics = [#tpu.dimension_semantics<parallel>, #tpu.dimension_semantics<arbitrary>], iteration_bounds = array<i64: 1, 1>, scalar_prefetch = 0 : i64, scratch_operands = 0 : i64, tpu.core_type = #tpu.core_type<tc>, window_params = [{transform_indices = @transform_0, window_bounds = array<i64: 512, 27>}, {transform_indices = @transform_1, window_bounds = array<i64: 27, 64>}, {transform_indices = @transform_2, window_bounds = array<i64: 1, 64>}, {transform_indices = @transform_3, window_bounds = array<i64: 1, 64>}, {transform_indices = @transform_4, window_bounds = array<i64: 512, 64>}]} {
    %c0_i32 = arith.constant 0 : i32
    %0 = arith.cmpi eq, %arg1, %c0_i32 : i32
    %1 = arith.extui %0 : i1 to i32
    %c0_i32_0 = arith.constant 0 : i32
    %2 = arith.cmpi ne, %1, %c0_i32_0 : i32
    scf.if %2 {
      %cst_10 = arith.constant 0.000000e+00 : f32
      %12 = vector.broadcast %cst_10 : f32 to vector<512x64xf32>
      %c0_11 = arith.constant 0 : index
      %c0_12 = arith.constant 0 : index
      %13 = vector.load %arg6[%c0_11, %c0_12] : memref<512x64xf32, #tpu.memory_space<vmem>>, vector<512x64xf32>
      tpu.vector_store %arg6[%c0_11, %c0_12], %12 {strides = array<i32>} : memref<512x64xf32, #tpu.memory_space<vmem>>, vector<512x64xf32>,
    } else {
    }
    %c0 = arith.constant 0 : index
    %c0_1 = arith.constant 0 : index
    %3 = vector.load %arg6[%c0, %c0_1] : memref<512x64xf32, #tpu.memory_space<vmem>>, vector<512x64xf32>
    %c0_2 = arith.constant 0 : index
    %c0_3 = arith.constant 0 : index
    %4 = vector.load %arg2[%c0_2, %c0_3] : memref<512x27xbf16, #tpu.memory_space<vmem>>, vector<512x27xbf16>
    %c0_4 = arith.constant 0 : index
    %c0_5 = arith.constant 0 : index
    %5 = vector.load %arg3[%c0_4, %c0_5] : memref<27x64xbf16, #tpu.memory_space<vmem>>, vector<27x64xbf16>
    %cst = arith.constant dense<0.000000e+00> : vector<512x64xf32>
    %6 = tpu.matmul %4, %5, %cst {dimension_numbers = #tpu.dot_dimension_numbers<[1], [0], [0], [1], [0, 0, 1, 1], [], []>} : vector<512x27xbf16>, vector<27x64xbf16>, vector<512x64xf32> -> vector<512x64xf32>
    %7 = arith.addf %3, %6 : vector<512x64xf32>
    %c0_6 = arith.constant 0 : index
    %c0_7 = arith.constant 0 : index
    %8 = vector.load %arg6[%c0_6, %c0_7] : memref<512x64xf32, #tpu.memory_space<vmem>>, vector<512x64xf32>
    tpu.vector_store %arg6[%c0_6, %c0_7], %7 {strides = array<i32>} : memref<512x64xf32, #tpu.memory_space<vmem>>, vector<512x64xf32>,
    %c0_i32_8 = arith.constant 0 : i32
    %9 = arith.cmpi eq, %arg1, %c0_i32_8 : i32
    %10 = arith.extui %9 : i1 to i32
    %c0_i32_9 = arith.constant 0 : i32
    %11 = arith.cmpi ne, %10, %c0_i32_9 : i32
    scf.if %11 {
      %c0_10 = arith.constant 0 : index
      %c0_11 = arith.constant 0 : index
      %12 = vector.load %arg6[%c0_10, %c0_11] : memref<512x64xf32, #tpu.memory_space<vmem>>, vector<512x64xf32>
      %cst_12 = arith.constant dense<0.000000e+00> : vector<64xf32>
      %13 = vector.multi_reduction <add>, %12, %cst_12 [0] : vector<512x64xf32> to vector<64xf32>
      %14 = vector.shape_cast %13 : vector<64xf32> to vector<1x64xf32>
      %cst_13 = arith.constant 5.120000e+02 : f32
      %15 = vector.broadcast %cst_13 : f32 to vector<1x64xf32>
      %16 = arith.divf %14, %15 : vector<1x64xf32>
      %17 = arith.mulf %12, %12 : vector<512x64xf32>
      %cst_14 = arith.constant dense<0.000000e+00> : vector<64xf32>
      %18 = vector.multi_reduction <add>, %17, %cst_14 [0] : vector<512x64xf32> to vector<64xf32>
      %19 = vector.shape_cast %18 : vector<64xf32> to vector<1x64xf32>
      %cst_15 = arith.constant 5.120000e+02 : f32
      %20 = vector.broadcast %cst_15 : f32 to vector<1x64xf32>
      %21 = arith.divf %19, %20 : vector<1x64xf32>
      %22 = arith.mulf %16, %16 : vector<1x64xf32>
      %23 = arith.subf %21, %22 : vector<1x64xf32>
      %24 = vector.broadcast %16 : vector<1x64xf32> to vector<512x64xf32>
      %25 = arith.subf %12, %24 : vector<512x64xf32>
      %cst_16 = arith.constant 9.99999974E-6 : f32
      %26 = vector.broadcast %cst_16 : f32 to vector<1x64xf32>
      %27 = arith.addf %23, %26 : vector<1x64xf32>
      %28 = math.rsqrt %27 : vector<1x64xf32>
      %29 = vector.broadcast %28 : vector<1x64xf32> to vector<512x64xf32>
      %30 = arith.mulf %25, %29 : vector<512x64xf32>
      %c0_17 = arith.constant 0 : index
      %c0_18 = arith.constant 0 : index
      %31 = vector.load %arg4[%c0_17, %c0_18] : memref<1x64xf32, #tpu.memory_space<vmem>>, vector<1x64xf32>
      %32 = vector.broadcast %31 : vector<1x64xf32> to vector<512x64xf32>
      %33 = arith.mulf %30, %32 : vector<512x64xf32>
      %c0_19 = arith.constant 0 : index
      %c0_20 = arith.constant 0 : index
      %34 = vector.load %arg5[%c0_19, %c0_20] : memref<1x64xf32, #tpu.memory_space<vmem>>, vector<1x64xf32>
      %35 = vector.broadcast %34 : vector<1x64xf32> to vector<512x64xf32>
      %36 = arith.addf %33, %35 : vector<512x64xf32>
      %cst_21 = arith.constant 0.000000e+00 : f32
      %37 = vector.broadcast %cst_21 : f32 to vector<512x64xf32>
      %38 = arith.maximumf %36, %37 : vector<512x64xf32>
      %c0_22 = arith.constant 0 : index
      %c0_23 = arith.constant 0 : index
      %39 = vector.load %arg6[%c0_22, %c0_23] : memref<512x64xf32, #tpu.memory_space<vmem>>, vector<512x64xf32>
      tpu.vector_store %arg6[%c0_22, %c0_23], %38 {strides = array<i32>} : memref<512x64xf32, #tpu.memory_space<vmem>>, vector<512x64xf32>,
    } else {
    }
    return
  }
  func.func @transform_0(%arg0: i32, %arg1: i32) -> (i32, i32) {
    %c0_i32 = arith.constant 0 : i32
    %c0_i32_0 = arith.constant 0 : i32
    return %c0_i32, %arg1 : i32, i32
  }
  func.func @transform_1(%arg0: i32, %arg1: i32) -> (i32, i32) {
    %c0_i32 = arith.constant 0 : i32
    return %arg1, %arg0 : i32, i32
  }
  func.func @transform_2(%arg0: i32, %arg1: i32) -> (i32, i32) {
    %c0_i32 = arith.constant 0 : i32
    %c0_i32_0 = arith.constant 0 : i32
    return %c0_i32, %arg0 : i32, i32
  }
  func.func @transform_3(%arg0: i32, %arg1: i32) -> (i32, i32) {
    %c0_i32 = arith.constant 0 : i32
    %c0_i32_0 = arith.constant 0 : i32
    return %c0_i32, %arg0 : i32, i32
  }
  func.func @transform_4(%arg0: i32, %arg1: i32) -> (i32, i32) {
    %c0_i32 = arith.constant 0 : i32
    %c0_i32_0 = arith.constant 0 : i32
    return %c0_i32, %arg0 : i32, i32
  }
}

</mosaic_0001>

<llo_original>
// kernel: tpu_custom_call.1
$region0: #{tpu_custom_call.1}
  #allocation0 [shape = 'u32[]', space=smem, size = 0x4, offset = 0x4, fixed_abs, tag = 'smem constant byte address 0x4 - core index']
  #allocation1 [shape = 'u32[72,128]{1,0:T(1,128)}', space=vmem, size = 0x9000, scoped, tag = 'internal scratch']
  %s0 = inlined_call_operand.vmem [shape: bf16[512,27], index: 0, kind: input, shape index: {}]
  %s1 = inlined_call_operand.vmem [shape: bf16[27,64], index: 1, kind: input, shape index: {}]
  %s2 = inlined_call_operand.vmem [shape: f32[1,64], index: 2, kind: input, shape index: {}]
  %s3 = inlined_call_operand.vmem [shape: f32[1,64], index: 3, kind: input, shape index: {}]
  %s4 = inlined_call_operand.vmem [shape: f32[512,64], index: 4, kind: output, shape index: {}]
  %s5 = sld [smem:[#allocation0]]
  $region34: #{tpu_custom_call.1} parent=0
    _
  %s7 = ssub.s32 1, %s5
  %s8 = scalar_select 0, %s7, %s5
  // Predicated region
  $region2: #{tpu_custom_call.1} parent=0 // pred_check
    _
  $region3: #{tpu_custom_call.1} parent=0 // pred_check_branch
    %10 = sbr.rel (0) target = $region5
  $region4: #{tpu_custom_call.1} parent=0 // pred_region
    _
  $region5: #{tpu_custom_call.1} parent=0 // pred_fallthru
    _
  // Predicated region
  $region6: #{tpu_custom_call.1} parent=0 // pred_check
    _
  $region7: #{tpu_custom_call.1} parent=0 // pred_check_branch
    %12 = sbr.rel (0) target = $region9
  $region8: #{tpu_custom_call.1} parent=0 // pred_region
    _
  $region9: #{tpu_custom_call.1} parent=0 // pred_fallthru
    _
  // Predicated region
  $region10: #{tpu_custom_call.1} parent=0 // pred_check
    _
  $region11: #{tpu_custom_call.1} parent=0 // pred_check_branch
    %14 = sbr.rel (0) target = $region13
  $region12: #{tpu_custom_call.1} parent=0 // pred_region
    _
  $region13: #{tpu_custom_call.1} parent=0 // pred_fallthru
    _
  // Predicated region
  $region14: #{tpu_custom_call.1} parent=0 // pred_check
    _
  $region15: #{tpu_custom_call.1} parent=0 // pred_check_branch
    %16 = sbr.rel (0) target = $region17
  $region16: #{tpu_custom_call.1} parent=0 // pred_region
    _
  $region17: #{tpu_custom_call.1} parent=0 // pred_fallthru
    _
  %p18 = scmp.eq.s32.totalorder 0, 0
  // Predicated region
  $region18: #{tpu_custom_call.1} parent=0 // pred_check
    %p19 = pneg %p18
  $region19: #{tpu_custom_call.1} parent=0 // pred_check_branch
    %21 = sbr.rel (%p19) target = $region21
  $region20: #{tpu_custom_call.1} parent=0 // pred_region
    %vm22 = vcmask 523264
    %23 = vst.msk [vmem:[%s4] sm:$0xff] %vm22, 0.0
    %24 = vst.msk [vmem:[%s4 + $0x8] sm:$0xff] %vm22, 0.0
    %25 = vst.msk [vmem:[%s4 + $0x10] sm:$0xff] %vm22, 0.0
    %26 = vst.msk [vmem:[%s4 + $0x18] sm:$0xff] %vm22, 0.0
    %27 = vst.msk [vmem:[%s4 + $0x20] sm:$0xff] %vm22, 0.0
    %28 = vst.msk [vmem:[%s4 + $0x28] sm:$0xff] %vm22, 0.0
    %29 = vst.msk [vmem:[%s4 + $0x30] sm:$0xff] %vm22, 0.0
    %30 = vst.msk [vmem:[%s4 + $0x38] sm:$0xff] %vm22, 0.0
    %31 = vst.msk [vmem:[%s4 + $0x40] sm:$0xff] %vm22, 0.0
    %32 = vst.msk [vmem:[%s4 + $0x48] sm:$0xff] %vm22, 0.0
    %33 = vst.msk [vmem:[%s4 + $0x50] sm:$0xff] %vm22, 0.0
    %34 = vst.msk [vmem:[%s4 + $0x58] sm:$0xff] %vm22, 0.0
    %35 = vst.msk [vmem:[%s4 + $0x60] sm:$0xff] %vm22, 0.0
    %36 = vst.msk [vmem:[%s4 + $0x68] sm:$0xff] %vm22, 0.0
    %37 = vst.msk [vmem:[%s4 + $0x70] sm:$0xff] %vm22, 0.0
    %38 = vst.msk [vmem:[%s4 + $0x78] sm:$0xff] %vm22, 0.0
    %39 = vst.msk [vmem:[%s4 + $0x80] sm:$0xff] %vm22, 0.0
    %40 = vst.msk [vmem:[%s4 + $0x88] sm:$0xff] %vm22, 0.0
    %41 = vst.msk [vmem:[%s4 + $0x90] sm:$0xff] %vm22, 0.0
    %42 = vst.msk [vmem:[%s4 + $0x98] sm:$0xff] %vm22, 0.0
    %43 = vst.msk [vmem:[%s4 + $0xa0] sm:$0xff] %vm22, 0.0
    %44 = vst.msk [vmem:[%s4 + $0xa8] sm:$0xff] %vm22, 0.0
    %45 = vst.msk [vmem:[%s4 + $0xb0] sm:$0xff] %vm22, 0.0
    %46 = vst.msk [vmem:[%s4 + $0xb8] sm:$0xff] %vm22, 0.0
    %47 = vst.msk [vmem:[%s4 + $0xc0] sm:$0xff] %vm22, 0.0
    %48 = vst.msk [vmem:[%s4 + $0xc8] sm:$0xff] %vm22, 0.0
    %49 = vst.msk [vmem:[%s4 + $0xd0] sm:$0xff] %vm22, 0.0
    %50 = vst.msk [vmem:[%s4 + $0xd8] sm:$0xff] %vm22, 0.0
    %51 = vst.msk [vmem:[%s4 + $0xe0] sm:$0xff] %vm22, 0.0
    %52 = vst.msk [vmem:[%s4 + $0xe8] sm:$0xff] %vm22, 0.0
    %53 = vst.msk [vmem:[%s4 + $0xf0] sm:$0xff] %vm22, 0.0
    %54 = vst.msk [vmem:[%s4 + $0xf8] sm:$0xff] %vm22, 0.0
    %55 = vst.msk [vmem:[%s4 + $0x100] sm:$0xff] %vm22, 0.0
    %56 = vst.msk [vmem:[%s4 + $0x108] sm:$0xff] %vm22, 0.0
    %57 = vst.msk [vmem:[%s4 + $0x110] sm:$0xff] %vm22, 0.0
    %58 = vst.msk [vmem:[%s4 + $0x118] sm:$0xff] %vm22, 0.0
    %59 = vst.msk [vmem:[%s4 + $0x120] sm:$0xff] %vm22, 0.0
    %60 = vst.msk [vmem:[%s4 + $0x128] sm:$0xff] %vm22, 0.0
    %61 = vst.msk [vmem:[%s4 + $0x130] sm:$0xff] %vm22, 0.0
    %62 = vst.msk [vmem:[%s4 + $0x138] sm:$0xff] %vm22, 0.0
    %63 = vst.msk [vmem:[%s4 + $0x140] sm:$0xff] %vm22, 0.0
    %64 = vst.msk [vmem:[%s4 + $0x148] sm:$0xff] %vm22, 0.0
    %65 = vst.msk [vmem:[%s4 + $0x150] sm:$0xff] %vm22, 0.0
    %66 = vst.msk [vmem:[%s4 + $0x158] sm:$0xff] %vm22, 0.0
    %67 = vst.msk [vmem:[%s4 + $0x160] sm:$0xff] %vm22, 0.0
    %68 = vst.msk [vmem:[%s4 + $0x168] sm:$0xff] %vm22, 0.0
    %69 = vst.msk [vmem:[%s4 + $0x170] sm:$0xff] %vm22, 0.0
    %70 = vst.msk [vmem:[%s4 + $0x178] sm:$0xff] %vm22, 0.0
    %71 = vst.msk [vmem:[%s4 + $0x180] sm:$0xff] %vm22, 0.0
    %72 = vst.msk [vmem:[%s4 + $0x188] sm:$0xff] %vm22, 0.0
    %73 = vst.msk [vmem:[%s4 + $0x190] sm:$0xff] %vm22, 0.0
    %74 = vst.msk [vmem:[%s4 + $0x198] sm:$0xff] %vm22, 0.0
    %75 = vst.msk [vmem:[%s4 + $0x1a0] sm:$0xff] %vm22, 0.0
    %76 = vst.msk [vmem:[%s4 + $0x1a8] sm:$0xff] %vm22, 0.0
    %77 = vst.msk [vmem:[%s4 + $0x1b0] sm:$0xff] %vm22, 0.0
    %78 = vst.msk [vmem:[%s4 + $0x1b8] sm:$0xff] %vm22, 0.0
    %79 = vst.msk [vmem:[%s4 + $0x1c0] sm:$0xff] %vm22, 0.0
    %80 = vst.msk [vmem:[%s4 + $0x1c8] sm:$0xff] %vm22, 0.0
    %81 = vst.msk [vmem:[%s4 + $0x1d0] sm:$0xff] %vm22, 0.0
    %82 = vst.msk [vmem:[%s4 + $0x1d8] sm:$0xff] %vm22, 0.0
    %83 = vst.msk [vmem:[%s4 + $0x1e0] sm:$0xff] %vm22, 0.0
    %84 = vst.msk [vmem:[%s4 + $0x1e8] sm:$0xff] %vm22, 0.0
    %85 = vst.msk [vmem:[%s4 + $0x1f0] sm:$0xff] %vm22, 0.0
    %86 = vst.msk [vmem:[%s4 + $0x1f8] sm:$0xff] %vm22, 0.0
  $region21: #{tpu_custom_call.1} parent=0 // pred_fallthru
    _
  %v87 = vld [vmem:[%s4] sm:$0xff]
  %v88 = vld [vmem:[%s4 + $0x8] sm:$0xff]
  %v89 = vld [vmem:[%s4 + $0x10] sm:$0xff]
  %v90 = vld [vmem:[%s4 + $0x18] sm:$0xff]
  %v91 = vld [vmem:[%s4 + $0x20] sm:$0xff]
  %v92 = vld [vmem:[%s4 + $0x28] sm:$0xff]
  %v93 = vld [vmem:[%s4 + $0x30] sm:$0xff]
  %v94 = vld [vmem:[%s4 + $0x38] sm:$0xff]
  %v95 = vld [vmem:[%s4 + $0x40] sm:$0xff]
  %v96 = vld [vmem:[%s4 + $0x48] sm:$0xff]
  %v97 = vld [vmem:[%s4 + $0x50] sm:$0xff]
  %v98 = vld [vmem:[%s4 + $0x58] sm:$0xff]
  %v99 = vld [vmem:[%s4 + $0x60] sm:$0xff]
  %v100 = vld [vmem:[%s4 + $0x68] sm:$0xff]
  %v101 = vld [vmem:[%s4 + $0x70] sm:$0xff]
  %v102 = vld [vmem:[%s4 + $0x78] sm:$0xff]
  %v103 = vld [vmem:[%s4 + $0x80] sm:$0xff]
  %v104 = vld [vmem:[%s4 + $0x88] sm:$0xff]
  %v105 = vld [vmem:[%s4 + $0x90] sm:$0xff]
  %v106 = vld [vmem:[%s4 + $0x98] sm:$0xff]
  %v107 = vld [vmem:[%s4 + $0xa0] sm:$0xff]
  %v108 = vld [vmem:[%s4 + $0xa8] sm:$0xff]
  %v109 = vld [vmem:[%s4 + $0xb0] sm:$0xff]
  %v110 = vld [vmem:[%s4 + $0xb8] sm:$0xff]
  %v111 = vld [vmem:[%s4 + $0xc0] sm:$0xff]
  %v112 = vld [vmem:[%s4 + $0xc8] sm:$0xff]
  %v113 = vld [vmem:[%s4 + $0xd0] sm:$0xff]
  %v114 = vld [vmem:[%s4 + $0xd8] sm:$0xff]
  %v115 = vld [vmem:[%s4 + $0xe0] sm:$0xff]
  %v116 = vld [vmem:[%s4 + $0xe8] sm:$0xff]
  %v117 = vld [vmem:[%s4 + $0xf0] sm:$0xff]
  %v118 = vld [vmem:[%s4 + $0xf8] sm:$0xff]
  %v119 = vld [vmem:[%s4 + $0x100] sm:$0xff]
  %v120 = vld [vmem:[%s4 + $0x108] sm:$0xff]
  %v121 = vld [vmem:[%s4 + $0x110] sm:$0xff]
  %v122 = vld [vmem:[%s4 + $0x118] sm:$0xff]
  %v123 = vld [vmem:[%s4 + $0x120] sm:$0xff]
  %v124 = vld [vmem:[%s4 + $0x128] sm:$0xff]
  %v125 = vld [vmem:[%s4 + $0x130] sm:$0xff]
  %v126 = vld [vmem:[%s4 + $0x138] sm:$0xff]
  %v127 = vld [vmem:[%s4 + $0x140] sm:$0xff]
  %v128 = vld [vmem:[%s4 + $0x148] sm:$0xff]
  %v129 = vld [vmem:[%s4 + $0x150] sm:$0xff]
  %v130 = vld [vmem:[%s4 + $0x158] sm:$0xff]
  %v131 = vld [vmem:[%s4 + $0x160] sm:$0xff]
  %v132 = vld [vmem:[%s4 + $0x168] sm:$0xff]
  %v133 = vld [vmem:[%s4 + $0x170] sm:$0xff]
  %v134 = vld [vmem:[%s4 + $0x178] sm:$0xff]
  %v135 = vld [vmem:[%s4 + $0x180] sm:$0xff]
  %v136 = vld [vmem:[%s4 + $0x188] sm:$0xff]
  %v137 = vld [vmem:[%s4 + $0x190] sm:$0xff]
  %v138 = vld [vmem:[%s4 + $0x198] sm:$0xff]
  %v139 = vld [vmem:[%s4 + $0x1a0] sm:$0xff]
  %v140 = vld [vmem:[%s4 + $0x1a8] sm:$0xff]
  %v141 = vld [vmem:[%s4 + $0x1b0] sm:$0xff]
  %v142 = vld [vmem:[%s4 + $0x1b8] sm:$0xff]
  %v143 = vld [vmem:[%s4 + $0x1c0] sm:$0xff]
  %v144 = vld [vmem:[%s4 + $0x1c8] sm:$0xff]
  %v145 = vld [vmem:[%s4 + $0x1d0] sm:$0xff]
  %v146 = vld [vmem:[%s4 + $0x1d8] sm:$0xff]
  %v147 = vld [vmem:[%s4 + $0x1e0] sm:$0xff]
  %v148 = vld [vmem:[%s4 + $0x1e8] sm:$0xff]
  %v149 = vld [vmem:[%s4 + $0x1f0] sm:$0xff]
  %v150 = vld [vmem:[%s4 + $0x1f8] sm:$0xff]
  %v151 = vld [vmem:[%s0] sm:$0xf]
  %v152 = vld [vmem:[%s0 + $0x4] sm:$0xf]
  %v153 = vld [vmem:[%s0 + $0x8] sm:$0xf]
  %v154 = vld [vmem:[%s0 + $0xc] sm:$0xf]
  %v155 = vld [vmem:[%s0 + $0x10] sm:$0xf]
  %v156 = vld [vmem:[%s0 + $0x14] sm:$0xf]
  %v157 = vld [vmem:[%s0 + $0x18] sm:$0xf]
  %v158 = vld [vmem:[%s0 + $0x1c] sm:$0xf]
  %v159 = vld [vmem:[%s0 + $0x20] sm:$0xf]
  %v160 = vld [vmem:[%s0 + $0x24] sm:$0xf]
  %v161 = vld [vmem:[%s0 + $0x28] sm:$0xf]
  %v162 = vld [vmem:[%s0 + $0x2c] sm:$0xf]
  %v163 = vld [vmem:[%s0 + $0x30] sm:$0xf]
  %v164 = vld [vmem:[%s0 + $0x34] sm:$0xf]
  %v165 = vld [vmem:[%s0 + $0x38] sm:$0xf]
  %v166 = vld [vmem:[%s0 + $0x3c] sm:$0xf]
  %v167 = vld [vmem:[%s0 + $0x40] sm:$0xf]
  %v168 = vld [vmem:[%s0 + $0x44] sm:$0xf]
  %v169 = vld [vmem:[%s0 + $0x48] sm:$0xf]
  %v170 = vld [vmem:[%s0 + $0x4c] sm:$0xf]
  %v171 = vld [vmem:[%s0 + $0x50] sm:$0xf]
  %v172 = vld [vmem:[%s0 + $0x54] sm:$0xf]
  %v173 = vld [vmem:[%s0 + $0x58] sm:$0xf]
  %v174 = vld [vmem:[%s0 + $0x5c] sm:$0xf]
  %v175 = vld [vmem:[%s0 + $0x60] sm:$0xf]
  %v176 = vld [vmem:[%s0 + $0x64] sm:$0xf]
  %v177 = vld [vmem:[%s0 + $0x68] sm:$0xf]
  %v178 = vld [vmem:[%s0 + $0x6c] sm:$0xf]
  %v179 = vld [vmem:[%s0 + $0x70] sm:$0xf]
  %v180 = vld [vmem:[%s0 + $0x74] sm:$0xf]
  %v181 = vld [vmem:[%s0 + $0x78] sm:$0xf]
  %v182 = vld [vmem:[%s0 + $0x7c] sm:$0xf]
  %v183 = vld [vmem:[%s0 + $0x80] sm:$0xf]
  %v184 = vld [vmem:[%s0 + $0x84] sm:$0xf]
  %v185 = vld [vmem:[%s0 + $0x88] sm:$0xf]
  %v186 = vld [vmem:[%s0 + $0x8c] sm:$0xf]
  %v187 = vld [vmem:[%s0 + $0x90] sm:$0xf]
  %v188 = vld [vmem:[%s0 + $0x94] sm:$0xf]
  %v189 = vld [vmem:[%s0 + $0x98] sm:$0xf]
  %v190 = vld [vmem:[%s0 + $0x9c] sm:$0xf]
  %v191 = vld [vmem:[%s0 + $0xa0] sm:$0xf]
  %v192 = vld [vmem:[%s0 + $0xa4] sm:$0xf]
  %v193 = vld [vmem:[%s0 + $0xa8] sm:$0xf]
  %v194 = vld [vmem:[%s0 + $0xac] sm:$0xf]
  %v195 = vld [vmem:[%s0 + $0xb0] sm:$0xf]
  %v196 = vld [vmem:[%s0 + $0xb4] sm:$0xf]
  %v197 = vld [vmem:[%s0 + $0xb8] sm:$0xf]
  %v198 = vld [vmem:[%s0 + $0xbc] sm:$0xf]
  %v199 = vld [vmem:[%s0 + $0xc0] sm:$0xf]
  %v200 = vld [vmem:[%s0 + $0xc4] sm:$0xf]
  %v201 = vld [vmem:[%s0 + $0xc8] sm:$0xf]
  %v202 = vld [vmem:[%s0 + $0xcc] sm:$0xf]
  %v203 = vld [vmem:[%s0 + $0xd0] sm:$0xf]
  %v204 = vld [vmem:[%s0 + $0xd4] sm:$0xf]
  %v205 = vld [vmem:[%s0 + $0xd8] sm:$0xf]
  %v206 = vld [vmem:[%s0 + $0xdc] sm:$0xf]
  %v207 = vld [vmem:[%s0 + $0xe0] sm:$0xf]
  %v208 = vld [vmem:[%s0 + $0xe4] sm:$0xf]
  %v209 = vld [vmem:[%s0 + $0xe8] sm:$0xf]
  %v210 = vld [vmem:[%s0 + $0xec] sm:$0xf]
  %v211 = vld [vmem:[%s0 + $0xf0] sm:$0xf]
  %v212 = vld [vmem:[%s0 + $0xf4] sm:$0xf]
  %v213 = vld [vmem:[%s0 + $0xf8] sm:$0xf]
  %v214 = vld [vmem:[%s0 + $0xfc] sm:$0xf]
  %v215 = vld [vmem:[%s1] sm:$0xf]
  %v216 = vld [vmem:[%s1 + $0x4] sm:$0xf]
  %v217 = vld [vmem:[%s1 + $0x8] sm:$0xf]
  %v218 = vld [vmem:[%s1 + $0xc] sm:$0x3]
  %v283 = vunpack.c.l.b16 %v151
  %v284 = vunpack.c.l.b16 %v152
  %v285 = vunpack.c.l.b16 %v153
  %v286 = vunpack.c.l.b16 %v154
  %v287 = vunpack.c.l.b16 %v155
  %v288 = vunpack.c.l.b16 %v156
  %v289 = vunpack.c.l.b16 %v157
  %v290 = vunpack.c.l.b16 %v158
  %v291 = vunpack.c.l.b16 %v159
  %v292 = vunpack.c.l.b16 %v160
  %v293 = vunpack.c.l.b16 %v161
  %v294 = vunpack.c.l.b16 %v162
  %v295 = vunpack.c.l.b16 %v163
  %v296 = vunpack.c.l.b16 %v164
  %v297 = vunpack.c.l.b16 %v165
  %v298 = vunpack.c.l.b16 %v166
  %v299 = vunpack.c.l.b16 %v167
  %v300 = vunpack.c.l.b16 %v168
  %v301 = vunpack.c.l.b16 %v169
  %v302 = vunpack.c.l.b16 %v170
  %v303 = vunpack.c.l.b16 %v171
  %v304 = vunpack.c.l.b16 %v172
  %v305 = vunpack.c.l.b16 %v173
  %v306 = vunpack.c.l.b16 %v174
  %v307 = vunpack.c.l.b16 %v175
  %v308 = vunpack.c.l.b16 %v176
  %v309 = vunpack.c.l.b16 %v177
  %v310 = vunpack.c.l.b16 %v178
  %v311 = vunpack.c.l.b16 %v179
  %v312 = vunpack.c.l.b16 %v180
  %v313 = vunpack.c.l.b16 %v181
  %v314 = vunpack.c.l.b16 %v182
  %v315 = vunpack.c.l.b16 %v183
  %v316 = vunpack.c.l.b16 %v184
  %v317 = vunpack.c.l.b16 %v185
  %v318 = vunpack.c.l.b16 %v186
  %v319 = vunpack.c.l.b16 %v187
  %v320 = vunpack.c.l.b16 %v188
  %v321 = vunpack.c.l.b16 %v189
  %v322 = vunpack.c.l.b16 %v190
  %v323 = vunpack.c.l.b16 %v191
  %v324 = vunpack.c.l.b16 %v192
  %v325 = vunpack.c.l.b16 %v193
  %v326 = vunpack.c.l.b16 %v194
  %v327 = vunpack.c.l.b16 %v195
  %v328 = vunpack.c.l.b16 %v196
  %v329 = vunpack.c.l.b16 %v197
  %v330 = vunpack.c.l.b16 %v198
  %v331 = vunpack.c.l.b16 %v199
  %v332 = vunpack.c.l.b16 %v200
  %v333 = vunpack.c.l.b16 %v201
  %v334 = vunpack.c.l.b16 %v202
  %v335 = vunpack.c.l.b16 %v203
  %v336 = vunpack.c.l.b16 %v204
  %v337 = vunpack.c.l.b16 %v205
  %v338 = vunpack.c.l.b16 %v206
  %v339 = vunpack.c.l.b16 %v207
  %v340 = vunpack.c.l.b16 %v208
  %v341 = vunpack.c.l.b16 %v209
  %v342 = vunpack.c.l.b16 %v210
  %v343 = vunpack.c.l.b16 %v211
  %v344 = vunpack.c.l.b16 %v212
  %v345 = vunpack.c.l.b16 %v213
  %v346 = vunpack.c.l.b16 %v214
  %v347 = vpack.c.b16 %v284, %v283
  %v348 = vpack.c.b16 %v286, %v285
  %v349 = vpack.c.b16 %v288, %v287
  %v350 = vpack.c.b16 %v290, %v289
  %v351 = vpack.c.b16 %v292, %v291
  %v352 = vpack.c.b16 %v294, %v293
  %v353 = vpack.c.b16 %v296, %v295
  %v354 = vpack.c.b16 %v298, %v297
  %v355 = vpack.c.b16 %v300, %v299
  %v356 = vpack.c.b16 %v302, %v301
  %v357 = vpack.c.b16 %v304, %v303
  %v358 = vpack.c.b16 %v306, %v305
  %v359 = vpack.c.b16 %v308, %v307
  %v360 = vpack.c.b16 %v310, %v309
  %v361 = vpack.c.b16 %v312, %v311
  %v362 = vpack.c.b16 %v314, %v313
  %v363 = vpack.c.b16 %v316, %v315
  %v364 = vpack.c.b16 %v318, %v317
  %v365 = vpack.c.b16 %v320, %v319
  %v366 = vpack.c.b16 %v322, %v321
  %v367 = vpack.c.b16 %v324, %v323
  %v368 = vpack.c.b16 %v326, %v325
  %v369 = vpack.c.b16 %v328, %v327
  %v370 = vpack.c.b16 %v330, %v329
  %v371 = vpack.c.b16 %v332, %v331
  %v372 = vpack.c.b16 %v334, %v333
  %v373 = vpack.c.b16 %v336, %v335
  %v374 = vpack.c.b16 %v338, %v337
  %v375 = vpack.c.b16 %v340, %v339
  %v376 = vpack.c.b16 %v342, %v341
  %v377 = vpack.c.b16 %v344, %v343
  %v378 = vpack.c.b16 %v346, %v345
  %v383 = vunpack.c.l.b16 %v215
  %v384 = vunpack.c.l.b16 %v216
  %v385 = vunpack.c.l.b16 %v217
  %v386 = vunpack.c.l.b16 %v218
  %v387 = vpack.c.b16 %v384, %v383
  %v388 = vpack.c.b16 %v386, %v385
  %vm390 = vcmask 220160
  %v392 = vsel %vm390, %v347, 0
  %v395 = vsel %vm390, %v348, 0
  %v398 = vsel %vm390, %v349, 0
  %v401 = vsel %vm390, %v350, 0
  %v404 = vsel %vm390, %v351, 0
  %v407 = vsel %vm390, %v352, 0
  %v410 = vsel %vm390, %v353, 0
  %v413 = vsel %vm390, %v354, 0
  %v416 = vsel %vm390, %v355, 0
  %v419 = vsel %vm390, %v356, 0
  %v422 = vsel %vm390, %v357, 0
  %v425 = vsel %vm390, %v358, 0
  %v428 = vsel %vm390, %v359, 0
  %v431 = vsel %vm390, %v360, 0
  %v434 = vsel %vm390, %v361, 0
  %v437 = vsel %vm390, %v362, 0
  %v440 = vsel %vm390, %v363, 0
  %v443 = vsel %vm390, %v364, 0
  %v446 = vsel %vm390, %v365, 0
  %v449 = vsel %vm390, %v366, 0
  %v452 = vsel %vm390, %v367, 0
  %v455 = vsel %vm390, %v368, 0
  %v458 = vsel %vm390, %v369, 0
  %v461 = vsel %vm390, %v370, 0
  %v464 = vsel %vm390, %v371, 0
  %v467 = vsel %vm390, %v372, 0
  %v470 = vsel %vm390, %v373, 0
  %v473 = vsel %vm390, %v374, 0
  %v476 = vsel %vm390, %v375, 0
  %v479 = vsel %vm390, %v376, 0
  %v482 = vsel %vm390, %v377, 0
  %v485 = vsel %vm390, %v378, 0
  %vm487 = vcmask 1044480
  %vm488 = vcmask 1045504
  %v489 = vsel %vm487, 4294967295, 65535
  %v490 = vsel %vm488, %v489, 0
  %v492 = vand.u32 %v388, %v490
  %494 = vmatpush.bf16.msra.mxu0 0
  %495 = vmatpush.bf16.msra.mxu0 0
  %496 = vmatpush.bf16.msra.mxu0 0
  %497 = vmatpush.bf16.msra.mxu0 0
  %498 = vmatpush.bf16.msra.mxu0 0
  %499 = vmatpush.bf16.msra.mxu0 0
  %500 = vmatpush.bf16.msra.mxu0 %v492
  %501 = vmatpush.bf16.msra.mxu0 %v387
  %502 = vmatmul.bf16.gmra.mxu0 %v392
  %v503 = vpop.f32.mrf.mxu0
  %v504 = vadd.f32 0.0, %v503
  %v505 = vpop.f32.mrf.mxu0
  %v506 = vadd.f32 0.0, %v505
  %507 = vmatmul.bf16.gmra.mxu0 %v395
  %v508 = vpop.f32.mrf.mxu0
  %v509 = vadd.f32 0.0, %v508
  %v510 = vpop.f32.mrf.mxu0
  %v511 = vadd.f32 0.0, %v510
  %512 = vmatmul.bf16.gmra.mxu0 %v398
  %v513 = vpop.f32.mrf.mxu0
  %v514 = vadd.f32 0.0, %v513
  %v515 = vpop.f32.mrf.mxu0
  %v516 = vadd.f32 0.0, %v515
  %517 = vmatmul.bf16.gmra.mxu0 %v401
  %v518 = vpop.f32.mrf.mxu0
  %v519 = vadd.f32 0.0, %v518
  %v520 = vpop.f32.mrf.mxu0
  %v521 = vadd.f32 0.0, %v520
  %522 = vmatmul.bf16.gmra.mxu0 %v404
  %v523 = vpop.f32.mrf.mxu0
  %v524 = vadd.f32 0.0, %v523
  %v525 = vpop.f32.mrf.mxu0
  %v526 = vadd.f32 0.0, %v525
  %527 = vmatmul.bf16.gmra.mxu0 %v407
  %v528 = vpop.f32.mrf.mxu0
  %v529 = vadd.f32 0.0, %v528
  %v530 = vpop.f32.mrf.mxu0
  %v531 = vadd.f32 0.0, %v530
  %532 = vmatmul.bf16.gmra.mxu0 %v410
  %v533 = vpop.f32.mrf.mxu0
  %v534 = vadd.f32 0.0, %v533
  %v535 = vpop.f32.mrf.mxu0
  %v536 = vadd.f32 0.0, %v535
  %537 = vmatmul.bf16.gmra.mxu0 %v413
  %v538 = vpop.f32.mrf.mxu0
  %v539 = vadd.f32 0.0, %v538
  %v540 = vpop.f32.mrf.mxu0
  %v541 = vadd.f32 0.0, %v540
  %542 = vmatmul.bf16.gmra.mxu0 %v416
  %v543 = vpop.f32.mrf.mxu0
  %v544 = vadd.f32 0.0, %v543
  %v545 = vpop.f32.mrf.mxu0
  %v546 = vadd.f32 0.0, %v545
  %547 = vmatmul.bf16.gmra.mxu0 %v419
  %v548 = vpop.f32.mrf.mxu0
  %v549 = vadd.f32 0.0, %v548
  %v550 = vpop.f32.mrf.mxu0
  %v551 = vadd.f32 0.0, %v550
  %552 = vmatmul.bf16.gmra.mxu0 %v422
  %v553 = vpop.f32.mrf.mxu0
  %v554 = vadd.f32 0.0, %v553
  %v555 = vpop.f32.mrf.mxu0
  %v556 = vadd.f32 0.0, %v555
  %557 = vmatmul.bf16.gmra.mxu0 %v425
  %v558 = vpop.f32.mrf.mxu0
  %v559 = vadd.f32 0.0, %v558
  %v560 = vpop.f32.mrf.mxu0
  %v561 = vadd.f32 0.0, %v560
  %562 = vmatmul.bf16.gmra.mxu0 %v428
  %v563 = vpop.f32.mrf.mxu0
  %v564 = vadd.f32 0.0, %v563
  %v565 = vpop.f32.mrf.mxu0
  %v566 = vadd.f32 0.0, %v565
  %567 = vmatmul.bf16.gmra.mxu0 %v431
  %v568 = vpop.f32.mrf.mxu0
  %v569 = vadd.f32 0.0, %v568
  %v570 = vpop.f32.mrf.mxu0
  %v571 = vadd.f32 0.0, %v570
  %572 = vmatmul.bf16.gmra.mxu0 %v434
  %v573 = vpop.f32.mrf.mxu0
  %v574 = vadd.f32 0.0, %v573
  %v575 = vpop.f32.mrf.mxu0
  %v576 = vadd.f32 0.0, %v575
  %577 = vmatmul.bf16.gmra.mxu0 %v437
  %v578 = vpop.f32.mrf.mxu0
  %v579 = vadd.f32 0.0, %v578
  %v580 = vpop.f32.mrf.mxu0
  %v581 = vadd.f32 0.0, %v580
  %582 = vmatmul.bf16.gmra.mxu0 %v440
  %v583 = vpop.f32.mrf.mxu0
  %v584 = vadd.f32 0.0, %v583
  %v585 = vpop.f32.mrf.mxu0
  %v586 = vadd.f32 0.0, %v585
  %587 = vmatmul.bf16.gmra.mxu0 %v443
  %v588 = vpop.f32.mrf.mxu0
  %v589 = vadd.f32 0.0, %v588
  %v590 = vpop.f32.mrf.mxu0
  %v591 = vadd.f32 0.0, %v590
  %592 = vmatmul.bf16.gmra.mxu0 %v446
  %v593 = vpop.f32.mrf.mxu0
  %v594 = vadd.f32 0.0, %v593
  %v595 = vpop.f32.mrf.mxu0
  %v596 = vadd.f32 0.0, %v595
  %597 = vmatmul.bf16.gmra.mxu0 %v449
  %v598 = vpop.f32.mrf.mxu0
  %v599 = vadd.f32 0.0, %v598
  %v600 = vpop.f32.mrf.mxu0
  %v601 = vadd.f32 0.0, %v600
  %602 = vmatmul.bf16.gmra.mxu0 %v452
  %v603 = vpop.f32.mrf.mxu0
  %v604 = vadd.f32 0.0, %v603
  %v605 = vpop.f32.mrf.mxu0
  %v606 = vadd.f32 0.0, %v605
  %607 = vmatmul.bf16.gmra.mxu0 %v455
  %v608 = vpop.f32.mrf.mxu0
  %v609 = vadd.f32 0.0, %v608
  %v610 = vpop.f32.mrf.mxu0
  %v611 = vadd.f32 0.0, %v610
  %612 = vmatmul.bf16.gmra.mxu0 %v458
  %v613 = vpop.f32.mrf.mxu0
  %v614 = vadd.f32 0.0, %v613
  %v615 = vpop.f32.mrf.mxu0
  %v616 = vadd.f32 0.0, %v615
  %617 = vmatmul.bf16.gmra.mxu0 %v461
  %v618 = vpop.f32.mrf.mxu0
  %v619 = vadd.f32 0.0, %v618
  %v620 = vpop.f32.mrf.mxu0
  %v621 = vadd.f32 0.0, %v620
  %622 = vmatmul.bf16.gmra.mxu0 %v464
  %v623 = vpop.f32.mrf.mxu0
  %v624 = vadd.f32 0.0, %v623
  %v625 = vpop.f32.mrf.mxu0
  %v626 = vadd.f32 0.0, %v625
  %627 = vmatmul.bf16.gmra.mxu0 %v467
  %v628 = vpop.f32.mrf.mxu0
  %v629 = vadd.f32 0.0, %v628
  %v630 = vpop.f32.mrf.mxu0
  %v631 = vadd.f32 0.0, %v630
  %632 = vmatmul.bf16.gmra.mxu0 %v470
  %v633 = vpop.f32.mrf.mxu0
  %v634 = vadd.f32 0.0, %v633
  %v635 = vpop.f32.mrf.mxu0
  %v636 = vadd.f32 0.0, %v635
  %637 = vmatmul.bf16.gmra.mxu0 %v473
  %v638 = vpop.f32.mrf.mxu0
  %v639 = vadd.f32 0.0, %v638
  %v640 = vpop.f32.mrf.mxu0
  %v641 = vadd.f32 0.0, %v640
  %642 = vmatmul.bf16.gmra.mxu0 %v476
  %v643 = vpop.f32.mrf.mxu0
  %v644 = vadd.f32 0.0, %v643
  %v645 = vpop.f32.mrf.mxu0
  %v646 = vadd.f32 0.0, %v645
  %647 = vmatmul.bf16.gmra.mxu0 %v479
  %v648 = vpop.f32.mrf.mxu0
  %v649 = vadd.f32 0.0, %v648
  %v650 = vpop.f32.mrf.mxu0
  %v651 = vadd.f32 0.0, %v650
  %652 = vmatmul.bf16.gmra.mxu0 %v482
  %v653 = vpop.f32.mrf.mxu0
  %v654 = vadd.f32 0.0, %v653
  %v655 = vpop.f32.mrf.mxu0
  %v656 = vadd.f32 0.0, %v655
  %657 = vmatmul.bf16.gmra.mxu0 %v485
  %v658 = vpop.f32.mrf.mxu0
  %v659 = vadd.f32 0.0, %v658
  %v660 = vpop.f32.mrf.mxu0
  %v661 = vadd.f32 0.0, %v660
  %662 = vdwg.mxu0
  %v663 = vadd.f32 %v87, %v504
  %v664 = vadd.f32 %v88, %v506
  %v665 = vadd.f32 %v89, %v509
  %v666 = vadd.f32 %v90, %v511
  %v667 = vadd.f32 %v91, %v514
  %v668 = vadd.f32 %v92, %v516
  %v669 = vadd.f32 %v93, %v519
  %v670 = vadd.f32 %v94, %v521
  %v671 = vadd.f32 %v95, %v524
  %v672 = vadd.f32 %v96, %v526
  %v673 = vadd.f32 %v97, %v529
  %v674 = vadd.f32 %v98, %v531
  %v675 = vadd.f32 %v99, %v534
  %v676 = vadd.f32 %v100, %v536
  %v677 = vadd.f32 %v101, %v539
  %v678 = vadd.f32 %v102, %v541
  %v679 = vadd.f32 %v103, %v544
  %v680 = vadd.f32 %v104, %v546
  %v681 = vadd.f32 %v105, %v549
  %v682 = vadd.f32 %v106, %v551
  %v683 = vadd.f32 %v107, %v554
  %v684 = vadd.f32 %v108, %v556
  %v685 = vadd.f32 %v109, %v559
  %v686 = vadd.f32 %v110, %v561
  %v687 = vadd.f32 %v111, %v564
  %v688 = vadd.f32 %v112, %v566
  %v689 = vadd.f32 %v113, %v569
  %v690 = vadd.f32 %v114, %v571
  %v691 = vadd.f32 %v115, %v574
  %v692 = vadd.f32 %v116, %v576
  %v693 = vadd.f32 %v117, %v579
  %v694 = vadd.f32 %v118, %v581
  %v695 = vadd.f32 %v119, %v584
  %v696 = vadd.f32 %v120, %v586
  %v697 = vadd.f32 %v121, %v589
  %v698 = vadd.f32 %v122, %v591
  %v699 = vadd.f32 %v123, %v594
  %v700 = vadd.f32 %v124, %v596
  %v701 = vadd.f32 %v125, %v599
  %v702 = vadd.f32 %v126, %v601
  %v703 = vadd.f32 %v127, %v604
  %v704 = vadd.f32 %v128, %v606
  %v705 = vadd.f32 %v129, %v609
  %v706 = vadd.f32 %v130, %v611
  %v707 = vadd.f32 %v131, %v614
  %v708 = vadd.f32 %v132, %v616
  %v709 = vadd.f32 %v133, %v619
  %v710 = vadd.f32 %v134, %v621
  %v711 = vadd.f32 %v135, %v624
  %v712 = vadd.f32 %v136, %v626
  %v713 = vadd.f32 %v137, %v629
  %v714 = vadd.f32 %v138, %v631
  %v715 = vadd.f32 %v139, %v634
  %v716 = vadd.f32 %v140, %v636
  %v717 = vadd.f32 %v141, %v639
  %v718 = vadd.f32 %v142, %v641
  %v719 = vadd.f32 %v143, %v644
  %v720 = vadd.f32 %v144, %v646
  %v721 = vadd.f32 %v145, %v649
  %v722 = vadd.f32 %v146, %v651
  %v723 = vadd.f32 %v147, %v654
  %v724 = vadd.f32 %v148, %v656
  %v725 = vadd.f32 %v149, %v659
  %v726 = vadd.f32 %v150, %v661
  %vm727 = vcmask 523264
  %728 = vst.msk [vmem:[%s4] sm:$0xff] %vm727, %v663
  %729 = vst.msk [vmem:[%s4 + $0x8] sm:$0xff] %vm727, %v664
  %730 = vst.msk [vmem:[%s4 + $0x10] sm:$0xff] %vm727, %v665
  %731 = vst.msk [vmem:[%s4 + $0x18] sm:$0xff] %vm727, %v666
  %732 = vst.msk [vmem:[%s4 + $0x20] sm:$0xff] %vm727, %v667
  %733 = vst.msk [vmem:[%s4 + $0x28] sm:$0xff] %vm727, %v668
  %734 = vst.msk [vmem:[%s4 + $0x30] sm:$0xff] %vm727, %v669
  %735 = vst.msk [vmem:[%s4 + $0x38] sm:$0xff] %vm727, %v670
  %736 = vst.msk [vmem:[%s4 + $0x40] sm:$0xff] %vm727, %v671
  %737 = vst.msk [vmem:[%s4 + $0x48] sm:$0xff] %vm727, %v672
  %738 = vst.msk [vmem:[%s4 + $0x50] sm:$0xff] %vm727, %v673
  %739 = vst.msk [vmem:[%s4 + $0x58] sm:$0xff] %vm727, %v674
  %740 = vst.msk [vmem:[%s4 + $0x60] sm:$0xff] %vm727, %v675
  %741 = vst.msk [vmem:[%s4 + $0x68] sm:$0xff] %vm727, %v676
  %742 = vst.msk [vmem:[%s4 + $0x70] sm:$0xff] %vm727, %v677
  %743 = vst.msk [vmem:[%s4 + $0x78] sm:$0xff] %vm727, %v678
  %744 = vst.msk [vmem:[%s4 + $0x80] sm:$0xff] %vm727, %v679
  %745 = vst.msk [vmem:[%s4 + $0x88] sm:$0xff] %vm727, %v680
  %746 = vst.msk [vmem:[%s4 + $0x90] sm:$0xff] %vm727, %v681
  %747 = vst.msk [vmem:[%s4 + $0x98] sm:$0xff] %vm727, %v682
  %748 = vst.msk [vmem:[%s4 + $0xa0] sm:$0xff] %vm727, %v683
  %749 = vst.msk [vmem:[%s4 + $0xa8] sm:$0xff] %vm727, %v684
  %750 = vst.msk [vmem:[%s4 + $0xb0] sm:$0xff] %vm727, %v685
  %751 = vst.msk [vmem:[%s4 + $0xb8] sm:$0xff] %vm727, %v686
  %752 = vst.msk [vmem:[%s4 + $0xc0] sm:$0xff] %vm727, %v687
  %753 = vst.msk [vmem:[%s4 + $0xc8] sm:$0xff] %vm727, %v688
  %754 = vst.msk [vmem:[%s4 + $0xd0] sm:$0xff] %vm727, %v689
  %755 = vst.msk [vmem:[%s4 + $0xd8] sm:$0xff] %vm727, %v690
  %756 = vst.msk [vmem:[%s4 + $0xe0] sm:$0xff] %vm727, %v691
  %757 = vst.msk [vmem:[%s4 + $0xe8] sm:$0xff] %vm727, %v692
  %758 = vst.msk [vmem:[%s4 + $0xf0] sm:$0xff] %vm727, %v693
  %759 = vst.msk [vmem:[%s4 + $0xf8] sm:$0xff] %vm727, %v694
  %760 = vst.msk [vmem:[%s4 + $0x100] sm:$0xff] %vm727, %v695
  %761 = vst.msk [vmem:[%s4 + $0x108] sm:$0xff] %vm727, %v696
  %762 = vst.msk [vmem:[%s4 + $0x110] sm:$0xff] %vm727, %v697
  %763 = vst.msk [vmem:[%s4 + $0x118] sm:$0xff] %vm727, %v698
  %764 = vst.msk [vmem:[%s4 + $0x120] sm:$0xff] %vm727, %v699
  %765 = vst.msk [vmem:[%s4 + $0x128] sm:$0xff] %vm727, %v700
  %766 = vst.msk [vmem:[%s4 + $0x130] sm:$0xff] %vm727, %v701
  %767 = vst.msk [vmem:[%s4 + $0x138] sm:$0xff] %vm727, %v702
  %768 = vst.msk [vmem:[%s4 + $0x140] sm:$0xff] %vm727, %v703
  %769 = vst.msk [vmem:[%s4 + $0x148] sm:$0xff] %vm727, %v704
  %770 = vst.msk [vmem:[%s4 + $0x150] sm:$0xff] %vm727, %v705
  %771 = vst.msk [vmem:[%s4 + $0x158] sm:$0xff] %vm727, %v706
  %772 = vst.msk [vmem:[%s4 + $0x160] sm:$0xff] %vm727, %v707
  %773 = vst.msk [vmem:[%s4 + $0x168] sm:$0xff] %vm727, %v708
  %774 = vst.msk [vmem:[%s4 + $0x170] sm:$0xff] %vm727, %v709
  %775 = vst.msk [vmem:[%s4 + $0x178] sm:$0xff] %vm727, %v710
  %776 = vst.msk [vmem:[%s4 + $0x180] sm:$0xff] %vm727, %v711
  %777 = vst.msk [vmem:[%s4 + $0x188] sm:$0xff] %vm727, %v712
  %778 = vst.msk [vmem:[%s4 + $0x190] sm:$0xff] %vm727, %v713
  %779 = vst.msk [vmem:[%s4 + $0x198] sm:$0xff] %vm727, %v714
  %780 = vst.msk [vmem:[%s4 + $0x1a0] sm:$0xff] %vm727, %v715
  %781 = vst.msk [vmem:[%s4 + $0x1a8] sm:$0xff] %vm727, %v716
  %782 = vst.msk [vmem:[%s4 + $0x1b0] sm:$0xff] %vm727, %v717
  %783 = vst.msk [vmem:[%s4 + $0x1b8] sm:$0xff] %vm727, %v718
  %784 = vst.msk [vmem:[%s4 + $0x1c0] sm:$0xff] %vm727, %v719
  %785 = vst.msk [vmem:[%s4 + $0x1c8] sm:$0xff] %vm727, %v720
  %786 = vst.msk [vmem:[%s4 + $0x1d0] sm:$0xff] %vm727, %v721
  %787 = vst.msk [vmem:[%s4 + $0x1d8] sm:$0xff] %vm727, %v722
  %788 = vst.msk [vmem:[%s4 + $0x1e0] sm:$0xff] %vm727, %v723
  %789 = vst.msk [vmem:[%s4 + $0x1e8] sm:$0xff] %vm727, %v724
  %790 = vst.msk [vmem:[%s4 + $0x1f0] sm:$0xff] %vm727, %v725
  %791 = vst.msk [vmem:[%s4 + $0x1f8] sm:$0xff] %vm727, %v726
  // Predicated region
  $region22: #{tpu_custom_call.1} parent=0 // pred_check
    %p792 = pneg %p18
  $region23: #{tpu_custom_call.1} parent=0 // pred_check_branch
    %794 = sbr.rel (%p792) target = $region25
  $region24: #{tpu_custom_call.1} parent=0 // pred_region
    %v795 = vld [vmem:[%s4] sm:$0xff]
    %v796 = vld [vmem:[%s4 + $0x8] sm:$0xff]
    %v797 = vld [vmem:[%s4 + $0x10] sm:$0xff]
    %v798 = vld [vmem:[%s4 + $0x18] sm:$0xff]
    %v799 = vld [vmem:[%s4 + $0x20] sm:$0xff]
    %v800 = vld [vmem:[%s4 + $0x28] sm:$0xff]
    %v801 = vld [vmem:[%s4 + $0x30] sm:$0xff]
    %v802 = vld [vmem:[%s4 + $0x38] sm:$0xff]
    %v803 = vld [vmem:[%s4 + $0x40] sm:$0xff]
    %v804 = vld [vmem:[%s4 + $0x48] sm:$0xff]
    %v805 = vld [vmem:[%s4 + $0x50] sm:$0xff]
    %v806 = vld [vmem:[%s4 + $0x58] sm:$0xff]
    %v807 = vld [vmem:[%s4 + $0x60] sm:$0xff]
    %v808 = vld [vmem:[%s4 + $0x68] sm:$0xff]
    %v809 = vld [vmem:[%s4 + $0x70] sm:$0xff]
    %v810 = vld [vmem:[%s4 + $0x78] sm:$0xff]
    %v811 = vld [vmem:[%s4 + $0x80] sm:$0xff]
    %v812 = vld [vmem:[%s4 + $0x88] sm:$0xff]
    %v813 = vld [vmem:[%s4 + $0x90] sm:$0xff]
    %v814 = vld [vmem:[%s4 + $0x98] sm:$0xff]
    %v815 = vld [vmem:[%s4 + $0xa0] sm:$0xff]
    %v816 = vld [vmem:[%s4 + $0xa8] sm:$0xff]
    %v817 = vld [vmem:[%s4 + $0xb0] sm:$0xff]
    %v818 = vld [vmem:[%s4 + $0xb8] sm:$0xff]
    %v819 = vld [vmem:[%s4 + $0xc0] sm:$0xff]
    %v820 = vld [vmem:[%s4 + $0xc8] sm:$0xff]
    %v821 = vld [vmem:[%s4 + $0xd0] sm:$0xff]
    %v822 = vld [vmem:[%s4 + $0xd8] sm:$0xff]
    %v823 = vld [vmem:[%s4 + $0xe0] sm:$0xff]
    %v824 = vld [vmem:[%s4 + $0xe8] sm:$0xff]
    %v825 = vld [vmem:[%s4 + $0xf0] sm:$0xff]
    %v826 = vld [vmem:[%s4 + $0xf8] sm:$0xff]
    %v827 = vld [vmem:[%s4 + $0x100] sm:$0xff]
    %v828 = vld [vmem:[%s4 + $0x108] sm:$0xff]
    %v829 = vld [vmem:[%s4 + $0x110] sm:$0xff]
    %v830 = vld [vmem:[%s4 + $0x118] sm:$0xff]
    %v831 = vld [vmem:[%s4 + $0x120] sm:$0xff]
    %v832 = vld [vmem:[%s4 + $0x128] sm:$0xff]
    %v833 = vld [vmem:[%s4 + $0x130] sm:$0xff]
    %v834 = vld [vmem:[%s4 + $0x138] sm:$0xff]
    %v835 = vld [vmem:[%s4 + $0x140] sm:$0xff]
    %v836 = vld [vmem:[%s4 + $0x148] sm:$0xff]
    %v837 = vld [vmem:[%s4 + $0x150] sm:$0xff]
    %v838 = vld [vmem:[%s4 + $0x158] sm:$0xff]
    %v839 = vld [vmem:[%s4 + $0x160] sm:$0xff]
    %v840 = vld [vmem:[%s4 + $0x168] sm:$0xff]
    %v841 = vld [vmem:[%s4 + $0x170] sm:$0xff]
    %v842 = vld [vmem:[%s4 + $0x178] sm:$0xff]
    %v843 = vld [vmem:[%s4 + $0x180] sm:$0xff]
    %v844 = vld [vmem:[%s4 + $0x188] sm:$0xff]
    %v845 = vld [vmem:[%s4 + $0x190] sm:$0xff]
    %v846 = vld [vmem:[%s4 + $0x198] sm:$0xff]
    %v847 = vld [vmem:[%s4 + $0x1a0] sm:$0xff]
    %v848 = vld [vmem:[%s4 + $0x1a8] sm:$0xff]
    %v849 = vld [vmem:[%s4 + $0x1b0] sm:$0xff]
    %v850 = vld [vmem:[%s4 + $0x1b8] sm:$0xff]
    %v851 = vld [vmem:[%s4 + $0x1c0] sm:$0xff]
    %v852 = vld [vmem:[%s4 + $0x1c8] sm:$0xff]
    %v853 = vld [vmem:[%s4 + $0x1d0] sm:$0xff]
    %v854 = vld [vmem:[%s4 + $0x1d8] sm:$0xff]
    %v855 = vld [vmem:[%s4 + $0x1e0] sm:$0xff]
    %v856 = vld [vmem:[%s4 + $0x1e8] sm:$0xff]
    %v857 = vld [vmem:[%s4 + $0x1f0] sm:$0xff]
    %v858 = vld [vmem:[%s4 + $0x1f8] sm:$0xff]
    %v859 = vsel %vm727, %v795, 0.0
    %v860 = vsel %vm727, %v796, 0.0
    %v861 = vadd.f32 %v859, %v860
    %v862 = vsel %vm727, %v797, 0.0
    %v863 = vadd.f32 %v861, %v862
    %v864 = vsel %vm727, %v798, 0.0
    %v865 = vadd.f32 %v863, %v864
    %v866 = vsel %vm727, %v799, 0.0
    %v867 = vadd.f32 %v865, %v866
    %v868 = vsel %vm727, %v800, 0.0
    %v869 = vadd.f32 %v867, %v868
    %v870 = vsel %vm727, %v801, 0.0
    %v871 = vadd.f32 %v869, %v870
    %v872 = vsel %vm727, %v802, 0.0
    %v873 = vadd.f32 %v871, %v872
    %v874 = vsel %vm727, %v803, 0.0
    %v875 = vadd.f32 %v873, %v874
    %v876 = vsel %vm727, %v804, 0.0
    %v877 = vadd.f32 %v875, %v876
    %v878 = vsel %vm727, %v805, 0.0
    %v879 = vadd.f32 %v877, %v878
    %v880 = vsel %vm727, %v806, 0.0
    %v881 = vadd.f32 %v879, %v880
    %v882 = vsel %vm727, %v807, 0.0
    %v883 = vadd.f32 %v881, %v882
    %v884 = vsel %vm727, %v808, 0.0
    %v885 = vadd.f32 %v883, %v884
    %v886 = vsel %vm727, %v809, 0.0
    %v887 = vadd.f32 %v885, %v886
    %v888 = vsel %vm727, %v810, 0.0
    %v889 = vadd.f32 %v887, %v888
    %v890 = vsel %vm727, %v811, 0.0
    %v891 = vadd.f32 %v889, %v890
    %v892 = vsel %vm727, %v812, 0.0
    %v893 = vadd.f32 %v891, %v892
    %v894 = vsel %vm727, %v813, 0.0
    %v895 = vadd.f32 %v893, %v894
    %v896 = vsel %vm727, %v814, 0.0
    %v897 = vadd.f32 %v895, %v896
    %v898 = vsel %vm727, %v815, 0.0
    %v899 = vadd.f32 %v897, %v898
    %v900 = vsel %vm727, %v816, 0.0
    %v901 = vadd.f32 %v899, %v900
    %v902 = vsel %vm727, %v817, 0.0
    %v903 = vadd.f32 %v901, %v902
    %v904 = vsel %vm727, %v818, 0.0
    %v905 = vadd.f32 %v903, %v904
    %v906 = vsel %vm727, %v819, 0.0
    %v907 = vadd.f32 %v905, %v906
    %v908 = vsel %vm727, %v820, 0.0
    %v909 = vadd.f32 %v907, %v908
    %v910 = vsel %vm727, %v821, 0.0
    %v911 = vadd.f32 %v909, %v910
    %v912 = vsel %vm727, %v822, 0.0
    %v913 = vadd.f32 %v911, %v912
    %v914 = vsel %vm727, %v823, 0.0
    %v915 = vadd.f32 %v913, %v914
    %v916 = vsel %vm727, %v824, 0.0
    %v917 = vadd.f32 %v915, %v916
    %v918 = vsel %vm727, %v825, 0.0
    %v919 = vadd.f32 %v917, %v918
    %v920 = vsel %vm727, %v826, 0.0
    %v921 = vadd.f32 %v919, %v920
    %v922 = vsel %vm727, %v827, 0.0
    %v923 = vadd.f32 %v921, %v922
    %v924 = vsel %vm727, %v828, 0.0
    %v925 = vadd.f32 %v923, %v924
    %v926 = vsel %vm727, %v829, 0.0
    %v927 = vadd.f32 %v925, %v926
    %v928 = vsel %vm727, %v830, 0.0
    %v929 = vadd.f32 %v927, %v928
    %v930 = vsel %vm727, %v831, 0.0
    %v931 = vadd.f32 %v929, %v930
    %v932 = vsel %vm727, %v832, 0.0
    %v933 = vadd.f32 %v931, %v932
    %v934 = vsel %vm727, %v833, 0.0
    %v935 = vadd.f32 %v933, %v934
    %v936 = vsel %vm727, %v834, 0.0
    %v937 = vadd.f32 %v935, %v936
    %v938 = vsel %vm727, %v835, 0.0
    %v939 = vadd.f32 %v937, %v938
    %v940 = vsel %vm727, %v836, 0.0
    %v941 = vadd.f32 %v939, %v940
    %v942 = vsel %vm727, %v837, 0.0
    %v943 = vadd.f32 %v941, %v942
    %v944 = vsel %vm727, %v838, 0.0
    %v945 = vadd.f32 %v943, %v944
    %v946 = vsel %vm727, %v839, 0.0
    %v947 = vadd.f32 %v945, %v946
    %v948 = vsel %vm727, %v840, 0.0
    %v949 = vadd.f32 %v947, %v948
    %v950 = vsel %vm727, %v841, 0.0
    %v951 = vadd.f32 %v949, %v950
    %v952 = vsel %vm727, %v842, 0.0
    %v953 = vadd.f32 %v951, %v952
    %v954 = vsel %vm727, %v843, 0.0
    %v955 = vadd.f32 %v953, %v954
    %v956 = vsel %vm727, %v844, 0.0
    %v957 = vadd.f32 %v955, %v956
    %v958 = vsel %vm727, %v845, 0.0
    %v959 = vadd.f32 %v957, %v958
    %v960 = vsel %vm727, %v846, 0.0
    %v961 = vadd.f32 %v959, %v960
    %v962 = vsel %vm727, %v847, 0.0
    %v963 = vadd.f32 %v961, %v962
    %v964 = vsel %vm727, %v848, 0.0
    %v965 = vadd.f32 %v963, %v964
    %v966 = vsel %vm727, %v849, 0.0
    %v967 = vadd.f32 %v965, %v966
    %v968 = vsel %vm727, %v850, 0.0
    %v969 = vadd.f32 %v967, %v968
    %v970 = vsel %vm727, %v851, 0.0
    %v971 = vadd.f32 %v969, %v970
    %v972 = vsel %vm727, %v852, 0.0
    %v973 = vadd.f32 %v971, %v972
    %v974 = vsel %vm727, %v853, 0.0
    %v975 = vadd.f32 %v973, %v974
    %v976 = vsel %vm727, %v854, 0.0
    %v977 = vadd.f32 %v975, %v976
    %v978 = vsel %vm727, %v855, 0.0
    %v979 = vadd.f32 %v977, %v978
    %v980 = vsel %vm727, %v856, 0.0
    %v981 = vadd.f32 %v979, %v980
    %v982 = vsel %vm727, %v857, 0.0
    %v983 = vadd.f32 %v981, %v982
    %v984 = vsel %vm727, %v858, 0.0
    %v985 = vadd.f32 %v983, %v984
    %v986 = vrot.slane %v985, 4
    %v987 = vadd.f32 %v985, %v986
    %v988 = vrot.slane %v987, 2
    %v989 = vadd.f32 %v987, %v988
    %v990 = vrot.slane %v989, 1
    %v991 = vadd.f32 %v989, %v990
    %v992 = vrcp.pop 512.0
    %v993 = vmul.f32 512.0, %v992
    %v994 = vsub.f32 1.0, %v993
    %v995 = vmul.f32 %v992, %v994
    %v996 = vadd.f32 %v992, %v995
    %vm997 = vweird.f32 %v992
    %v998 = vsel %vm997, %v992, %v996
    %v999 = vmul.f32 %v991, %v998
    %v1000 = vmul.f32 %v795, %v795
    %v1001 = vmul.f32 %v796, %v796
    %v1002 = vmul.f32 %v797, %v797
    %v1003 = vmul.f32 %v798, %v798
    %v1004 = vmul.f32 %v799, %v799
    %v1005 = vmul.f32 %v800, %v800
    %v1006 = vmul.f32 %v801, %v801
    %v1007 = vmul.f32 %v802, %v802
    %v1008 = vmul.f32 %v803, %v803
    %v1009 = vmul.f32 %v804, %v804
    %v1010 = vmul.f32 %v805, %v805
    %v1011 = vmul.f32 %v806, %v806
    %v1012 = vmul.f32 %v807, %v807
    %v1013 = vmul.f32 %v808, %v808
    %v1014 = vmul.f32 %v809, %v809
    %v1015 = vmul.f32 %v810, %v810
    %v1016 = vmul.f32 %v811, %v811
    %v1017 = vmul.f32 %v812, %v812
    %v1018 = vmul.f32 %v813, %v813
    %v1019 = vmul.f32 %v814, %v814
    %v1020 = vmul.f32 %v815, %v815
    %v1021 = vmul.f32 %v816, %v816
    %v1022 = vmul.f32 %v817, %v817
    %v1023 = vmul.f32 %v818, %v818
    %v1024 = vmul.f32 %v819, %v819
    %v1025 = vmul.f32 %v820, %v820
    %v1026 = vmul.f32 %v821, %v821
    %v1027 = vmul.f32 %v822, %v822
    %v1028 = vmul.f32 %v823, %v823
    %v1029 = vmul.f32 %v824, %v824
    %v1030 = vmul.f32 %v825, %v825
    %v1031 = vmul.f32 %v826, %v826
    %v1032 = vmul.f32 %v827, %v827
    %v1033 = vmul.f32 %v828, %v828
    %v1034 = vmul.f32 %v829, %v829
    %v1035 = vmul.f32 %v830, %v830
    %v1036 = vmul.f32 %v831, %v831
    %v1037 = vmul.f32 %v832, %v832
    %v1038 = vmul.f32 %v833, %v833
    %v1039 = vmul.f32 %v834, %v834
    %v1040 = vmul.f32 %v835, %v835
    %v1041 = vmul.f32 %v836, %v836
    %v1042 = vmul.f32 %v837, %v837
    %v1043 = vmul.f32 %v838, %v838
    %v1044 = vmul.f32 %v839, %v839
    %v1045 = vmul.f32 %v840, %v840
    %v1046 = vmul.f32 %v841, %v841
    %v1047 = vmul.f32 %v842, %v842
    %v1048 = vmul.f32 %v843, %v843
    %v1049 = vmul.f32 %v844, %v844
    %v1050 = vmul.f32 %v845, %v845
    %v1051 = vmul.f32 %v846, %v846
    %v1052 = vmul.f32 %v847, %v847
    %v1053 = vmul.f32 %v848, %v848
    %v1054 = vmul.f32 %v849, %v849
    %v1055 = vmul.f32 %v850, %v850
    %v1056 = vmul.f32 %v851, %v851
    %v1057 = vmul.f32 %v852, %v852
    %v1058 = vmul.f32 %v853, %v853
    %v1059 = vmul.f32 %v854, %v854
    %v1060 = vmul.f32 %v855, %v855
    %v1061 = vmul.f32 %v856, %v856
    %v1062 = vmul.f32 %v857, %v857
    %v1063 = vmul.f32 %v858, %v858
    %v1064 = vsel %vm727, %v1000, 0.0
    %v1065 = vsel %vm727, %v1001, 0.0
    %v1066 = vadd.f32 %v1064, %v1065
    %v1067 = vsel %vm727, %v1002, 0.0
    %v1068 = vadd.f32 %v1066, %v1067
    %v1069 = vsel %vm727, %v1003, 0.0
    %v1070 = vadd.f32 %v1068, %v1069
    %v1071 = vsel %vm727, %v1004, 0.0
    %v1072 = vadd.f32 %v1070, %v1071
    %v1073 = vsel %vm727, %v1005, 0.0
    %v1074 = vadd.f32 %v1072, %v1073
    %v1075 = vsel %vm727, %v1006, 0.0
    %v1076 = vadd.f32 %v1074, %v1075
    %v1077 = vsel %vm727, %v1007, 0.0
    %v1078 = vadd.f32 %v1076, %v1077
    %v1079 = vsel %vm727, %v1008, 0.0
    %v1080 = vadd.f32 %v1078, %v1079
    %v1081 = vsel %vm727, %v1009, 0.0
    %v1082 = vadd.f32 %v1080, %v1081
    %v1083 = vsel %vm727, %v1010, 0.0
    %v1084 = vadd.f32 %v1082, %v1083
    %v1085 = vsel %vm727, %v1011, 0.0
    %v1086 = vadd.f32 %v1084, %v1085
    %v1087 = vsel %vm727, %v1012, 0.0
    %v1088 = vadd.f32 %v1086, %v1087
    %v1089 = vsel %vm727, %v1013, 0.0
    %v1090 = vadd.f32 %v1088, %v1089
    %v1091 = vsel %vm727, %v1014, 0.0
    %v1092 = vadd.f32 %v1090, %v1091
    %v1093 = vsel %vm727, %v1015, 0.0
    %v1094 = vadd.f32 %v1092, %v1093
    %v1095 = vsel %vm727, %v1016, 0.0
    %v1096 = vadd.f32 %v1094, %v1095
    %v1097 = vsel %vm727, %v1017, 0.0
    %v1098 = vadd.f32 %v1096, %v1097
    %v1099 = vsel %vm727, %v1018, 0.0
    %v1100 = vadd.f32 %v1098, %v1099
    %v1101 = vsel %vm727, %v1019, 0.0
    %v1102 = vadd.f32 %v1100, %v1101
    %v1103 = vsel %vm727, %v1020, 0.0
    %v1104 = vadd.f32 %v1102, %v1103
    %v1105 = vsel %vm727, %v1021, 0.0
    %v1106 = vadd.f32 %v1104, %v1105
    %v1107 = vsel %vm727, %v1022, 0.0
    %v1108 = vadd.f32 %v1106, %v1107
    %v1109 = vsel %vm727, %v1023, 0.0
    %v1110 = vadd.f32 %v1108, %v1109
    %v1111 = vsel %vm727, %v1024, 0.0
    %v1112 = vadd.f32 %v1110, %v1111
    %v1113 = vsel %vm727, %v1025, 0.0
    %v1114 = vadd.f32 %v1112, %v1113
    %v1115 = vsel %vm727, %v1026, 0.0
    %v1116 = vadd.f32 %v1114, %v1115
    %v1117 = vsel %vm727, %v1027, 0.0
    %v1118 = vadd.f32 %v1116, %v1117
    %v1119 = vsel %vm727, %v1028, 0.0
    %v1120 = vadd.f32 %v1118, %v1119
    %v1121 = vsel %vm727, %v1029, 0.0
    %v1122 = vadd.f32 %v1120, %v1121
    %v1123 = vsel %vm727, %v1030, 0.0
    %v1124 = vadd.f32 %v1122, %v1123
    %v1125 = vsel %vm727, %v1031, 0.0
    %v1126 = vadd.f32 %v1124, %v1125
    %v1127 = vsel %vm727, %v1032, 0.0
    %v1128 = vadd.f32 %v1126, %v1127
    %v1129 = vsel %vm727, %v1033, 0.0
    %v1130 = vadd.f32 %v1128, %v1129
    %v1131 = vsel %vm727, %v1034, 0.0
    %v1132 = vadd.f32 %v1130, %v1131
    %v1133 = vsel %vm727, %v1035, 0.0
    %v1134 = vadd.f32 %v1132, %v1133
    %v1135 = vsel %vm727, %v1036, 0.0
    %v1136 = vadd.f32 %v1134, %v1135
    %v1137 = vsel %vm727, %v1037, 0.0
    %v1138 = vadd.f32 %v1136, %v1137
    %v1139 = vsel %vm727, %v1038, 0.0
    %v1140 = vadd.f32 %v1138, %v1139
    %v1141 = vsel %vm727, %v1039, 0.0
    %v1142 = vadd.f32 %v1140, %v1141
    %v1143 = vsel %vm727, %v1040, 0.0
    %v1144 = vadd.f32 %v1142, %v1143
    %v1145 = vsel %vm727, %v1041, 0.0
    %v1146 = vadd.f32 %v1144, %v1145
    %v1147 = vsel %vm727, %v1042, 0.0
    %v1148 = vadd.f32 %v1146, %v1147
    %v1149 = vsel %vm727, %v1043, 0.0
    %v1150 = vadd.f32 %v1148, %v1149
    %v1151 = vsel %vm727, %v1044, 0.0
    %v1152 = vadd.f32 %v1150, %v1151
    %v1153 = vsel %vm727, %v1045, 0.0
    %v1154 = vadd.f32 %v1152, %v1153
    %v1155 = vsel %vm727, %v1046, 0.0
    %v1156 = vadd.f32 %v1154, %v1155
    %v1157 = vsel %vm727, %v1047, 0.0
    %v1158 = vadd.f32 %v1156, %v1157
    %v1159 = vsel %vm727, %v1048, 0.0
    %v1160 = vadd.f32 %v1158, %v1159
    %v1161 = vsel %vm727, %v1049, 0.0
    %v1162 = vadd.f32 %v1160, %v1161
    %v1163 = vsel %vm727, %v1050, 0.0
    %v1164 = vadd.f32 %v1162, %v1163
    %v1165 = vsel %vm727, %v1051, 0.0
    %v1166 = vadd.f32 %v1164, %v1165
    %v1167 = vsel %vm727, %v1052, 0.0
    %v1168 = vadd.f32 %v1166, %v1167
    %v1169 = vsel %vm727, %v1053, 0.0
    %v1170 = vadd.f32 %v1168, %v1169
    %v1171 = vsel %vm727, %v1054, 0.0
    %v1172 = vadd.f32 %v1170, %v1171
    %v1173 = vsel %vm727, %v1055, 0.0
    %v1174 = vadd.f32 %v1172, %v1173
    %v1175 = vsel %vm727, %v1056, 0.0
    %v1176 = vadd.f32 %v1174, %v1175
    %v1177 = vsel %vm727, %v1057, 0.0
    %v1178 = vadd.f32 %v1176, %v1177
    %v1179 = vsel %vm727, %v1058, 0.0
    %v1180 = vadd.f32 %v1178, %v1179
    %v1181 = vsel %vm727, %v1059, 0.0
    %v1182 = vadd.f32 %v1180, %v1181
    %v1183 = vsel %vm727, %v1060, 0.0
    %v1184 = vadd.f32 %v1182, %v1183
    %v1185 = vsel %vm727, %v1061, 0.0
    %v1186 = vadd.f32 %v1184, %v1185
    %v1187 = vsel %vm727, %v1062, 0.0
    %v1188 = vadd.f32 %v1186, %v1187
    %v1189 = vsel %vm727, %v1063, 0.0
    %v1190 = vadd.f32 %v1188, %v1189
    %v1191 = vrot.slane %v1190, 4
    %v1192 = vadd.f32 %v1190, %v1191
    %v1193 = vrot.slane %v1192, 2
    %v1194 = vadd.f32 %v1192, %v1193
    %v1195 = vrot.slane %v1194, 1
    %v1196 = vadd.f32 %v1194, %v1195
    %v1197 = vmul.f32 %v1196, %v998
    %v1198 = vmul.f32 %v999, %v999
    %v1199 = vsub.f32 %v1197, %v1198
    %v1200 = vsub.f32 %v795, %v999
    %v1201 = vsub.f32 %v796, %v999
    %v1202 = vsub.f32 %v797, %v999
    %v1203 = vsub.f32 %v798, %v999
    %v1204 = vsub.f32 %v799, %v999
    %v1205 = vsub.f32 %v800, %v999
    %v1206 = vsub.f32 %v801, %v999
    %v1207 = vsub.f32 %v802, %v999
    %v1208 = vsub.f32 %v803, %v999
    %v1209 = vsub.f32 %v804, %v999
    %v1210 = vsub.f32 %v805, %v999
    %v1211 = vsub.f32 %v806, %v999
    %v1212 = vsub.f32 %v807, %v999
    %v1213 = vsub.f32 %v808, %v999
    %v1214 = vsub.f32 %v809, %v999
    %v1215 = vsub.f32 %v810, %v999
    %v1216 = vsub.f32 %v811, %v999
    %v1217 = vsub.f32 %v812, %v999
    %v1218 = vsub.f32 %v813, %v999
    %v1219 = vsub.f32 %v814, %v999
    %v1220 = vsub.f32 %v815, %v999
    %v1221 = vsub.f32 %v816, %v999
    %v1222 = vsub.f32 %v817, %v999
    %v1223 = vsub.f32 %v818, %v999
    %v1224 = vsub.f32 %v819, %v999
    %v1225 = vsub.f32 %v820, %v999
    %v1226 = vsub.f32 %v821, %v999
    %v1227 = vsub.f32 %v822, %v999
    %v1228 = vsub.f32 %v823, %v999
    %v1229 = vsub.f32 %v824, %v999
    %v1230 = vsub.f32 %v825, %v999
    %v1231 = vsub.f32 %v826, %v999
    %v1232 = vsub.f32 %v827, %v999
    %v1233 = vsub.f32 %v828, %v999
    %v1234 = vsub.f32 %v829, %v999
    %v1235 = vsub.f32 %v830, %v999
    %v1236 = vsub.f32 %v831, %v999
    %v1237 = vsub.f32 %v832, %v999
    %v1238 = vsub.f32 %v833, %v999
    %v1239 = vsub.f32 %v834, %v999
    %v1240 = vsub.f32 %v835, %v999
    %v1241 = vsub.f32 %v836, %v999
    %v1242 = vsub.f32 %v837, %v999
    %v1243 = vsub.f32 %v838, %v999
    %v1244 = vsub.f32 %v839, %v999
    %v1245 = vsub.f32 %v840, %v999
    %v1246 = vsub.f32 %v841, %v999
    %v1247 = vsub.f32 %v842, %v999
    %v1248 = vsub.f32 %v843, %v999
    %v1249 = vsub.f32 %v844, %v999
    %v1250 = vsub.f32 %v845, %v999
    %v1251 = vsub.f32 %v846, %v999
    %v1252 = vsub.f32 %v847, %v999
    %v1253 = vsub.f32 %v848, %v999
    %v1254 = vsub.f32 %v849, %v999
    %v1255 = vsub.f32 %v850, %v999
    %v1256 = vsub.f32 %v851, %v999
    %v1257 = vsub.f32 %v852, %v999
    %v1258 = vsub.f32 %v853, %v999
    %v1259 = vsub.f32 %v854, %v999
    %v1260 = vsub.f32 %v855, %v999
    %v1261 = vsub.f32 %v856, %v999
    %v1262 = vsub.f32 %v857, %v999
    %v1263 = vsub.f32 %v858, %v999
    %v1264 = vadd.f32 %v1199, 1e-05
    %v1265 = vrsqrt.pop %v1264
    %v1266 = vmul.f32 %v1265, %v1264
    %v1267 = vmul.f32 %v1266, %v1265
    %v1268 = vmul.f32 0.5, %v1267
    %v1269 = vsub.f32 1.5, %v1268
    %v1270 = vmul.f32 %v1265, %v1269
    %vm1271 = vweird.f32 %v1264
    %vm1272 = vweird.f32 %v1265
    %vm1273 = vmor %vm1271, %vm1272
    %v1274 = vsel %vm1273, %v1265, %v1270
    %v1275 = vmul.f32 %v1200, %v1274
    %v1276 = vmul.f32 %v1201, %v1274
    %v1277 = vmul.f32 %v1202, %v1274
    %v1278 = vmul.f32 %v1203, %v1274
    %v1279 = vmul.f32 %v1204, %v1274
    %v1280 = vmul.f32 %v1205, %v1274
    %v1281 = vmul.f32 %v1206, %v1274
    %v1282 = vmul.f32 %v1207, %v1274
    %v1283 = vmul.f32 %v1208, %v1274
    %v1284 = vmul.f32 %v1209, %v1274
    %v1285 = vmul.f32 %v1210, %v1274
    %v1286 = vmul.f32 %v1211, %v1274
    %v1287 = vmul.f32 %v1212, %v1274
    %v1288 = vmul.f32 %v1213, %v1274
    %v1289 = vmul.f32 %v1214, %v1274
    %v1290 = vmul.f32 %v1215, %v1274
    %v1291 = vmul.f32 %v1216, %v1274
    %v1292 = vmul.f32 %v1217, %v1274
    %v1293 = vmul.f32 %v1218, %v1274
    %v1294 = vmul.f32 %v1219, %v1274
    %v1295 = vmul.f32 %v1220, %v1274
    %v1296 = vmul.f32 %v1221, %v1274
    %v1297 = vmul.f32 %v1222, %v1274
    %v1298 = vmul.f32 %v1223, %v1274
    %v1299 = vmul.f32 %v1224, %v1274
    %v1300 = vmul.f32 %v1225, %v1274
    %v1301 = vmul.f32 %v1226, %v1274
    %v1302 = vmul.f32 %v1227, %v1274
    %v1303 = vmul.f32 %v1228, %v1274
    %v1304 = vmul.f32 %v1229, %v1274
    %v1305 = vmul.f32 %v1230, %v1274
    %v1306 = vmul.f32 %v1231, %v1274
    %v1307 = vmul.f32 %v1232, %v1274
    %v1308 = vmul.f32 %v1233, %v1274
    %v1309 = vmul.f32 %v1234, %v1274
    %v1310 = vmul.f32 %v1235, %v1274
    %v1311 = vmul.f32 %v1236, %v1274
    %v1312 = vmul.f32 %v1237, %v1274
    %v1313 = vmul.f32 %v1238, %v1274
    %v1314 = vmul.f32 %v1239, %v1274
    %v1315 = vmul.f32 %v1240, %v1274
    %v1316 = vmul.f32 %v1241, %v1274
    %v1317 = vmul.f32 %v1242, %v1274
    %v1318 = vmul.f32 %v1243, %v1274
    %v1319 = vmul.f32 %v1244, %v1274
    %v1320 = vmul.f32 %v1245, %v1274
    %v1321 = vmul.f32 %v1246, %v1274
    %v1322 = vmul.f32 %v1247, %v1274
    %v1323 = vmul.f32 %v1248, %v1274
    %v1324 = vmul.f32 %v1249, %v1274
    %v1325 = vmul.f32 %v1250, %v1274
    %v1326 = vmul.f32 %v1251, %v1274
    %v1327 = vmul.f32 %v1252, %v1274
    %v1328 = vmul.f32 %v1253, %v1274
    %v1329 = vmul.f32 %v1254, %v1274
    %v1330 = vmul.f32 %v1255, %v1274
    %v1331 = vmul.f32 %v1256, %v1274
    %v1332 = vmul.f32 %v1257, %v1274
    %v1333 = vmul.f32 %v1258, %v1274
    %v1334 = vmul.f32 %v1259, %v1274
    %v1335 = vmul.f32 %v1260, %v1274
    %v1336 = vmul.f32 %v1261, %v1274
    %v1337 = vmul.f32 %v1262, %v1274
    %v1338 = vmul.f32 %v1263, %v1274
    %v1339 = vld [vmem:[%s2] sm:$0x1]
    %v1341 = vperm.slane %v1339, 0
    %v1343 = vmul.f32 %v1275, %v1341
    %v1344 = vmul.f32 %v1276, %v1341
    %v1345 = vmul.f32 %v1277, %v1341
    %v1346 = vmul.f32 %v1278, %v1341
    %v1347 = vmul.f32 %v1279, %v1341
    %v1348 = vmul.f32 %v1280, %v1341
    %v1349 = vmul.f32 %v1281, %v1341
    %v1350 = vmul.f32 %v1282, %v1341
    %v1351 = vmul.f32 %v1283, %v1341
    %v1352 = vmul.f32 %v1284, %v1341
    %v1353 = vmul.f32 %v1285, %v1341
    %v1354 = vmul.f32 %v1286, %v1341
    %v1355 = vmul.f32 %v1287, %v1341
    %v1356 = vmul.f32 %v1288, %v1341
    %v1357 = vmul.f32 %v1289, %v1341
    %v1358 = vmul.f32 %v1290, %v1341
    %v1359 = vmul.f32 %v1291, %v1341
    %v1360 = vmul.f32 %v1292, %v1341
    %v1361 = vmul.f32 %v1293, %v1341
    %v1362 = vmul.f32 %v1294, %v1341
    %v1363 = vmul.f32 %v1295, %v1341
    %v1364 = vmul.f32 %v1296, %v1341
    %v1365 = vmul.f32 %v1297, %v1341
    %v1366 = vmul.f32 %v1298, %v1341
    %v1367 = vmul.f32 %v1299, %v1341
    %v1368 = vmul.f32 %v1300, %v1341
    %v1369 = vmul.f32 %v1301, %v1341
    %v1370 = vmul.f32 %v1302, %v1341
    %v1371 = vmul.f32 %v1303, %v1341
    %v1372 = vmul.f32 %v1304, %v1341
    %v1373 = vmul.f32 %v1305, %v1341
    %v1374 = vmul.f32 %v1306, %v1341
    %v1375 = vmul.f32 %v1307, %v1341
    %v1376 = vmul.f32 %v1308, %v1341
    %v1377 = vmul.f32 %v1309, %v1341
    %v1378 = vmul.f32 %v1310, %v1341
    %v1379 = vmul.f32 %v1311, %v1341
    %v1380 = vmul.f32 %v1312, %v1341
    %v1381 = vmul.f32 %v1313, %v1341
    %v1382 = vmul.f32 %v1314, %v1341
    %v1383 = vmul.f32 %v1315, %v1341
    %v1384 = vmul.f32 %v1316, %v1341
    %v1385 = vmul.f32 %v1317, %v1341
    %v1386 = vmul.f32 %v1318, %v1341
    %v1387 = vmul.f32 %v1319, %v1341
    %v1388 = vmul.f32 %v1320, %v1341
    %v1389 = vmul.f32 %v1321, %v1341
    %v1390 = vmul.f32 %v1322, %v1341
    %v1391 = vmul.f32 %v1323, %v1341
    %v1392 = vmul.f32 %v1324, %v1341
    %v1393 = vmul.f32 %v1325, %v1341
    %v1394 = vmul.f32 %v1326, %v1341
    %v1395 = vmul.f32 %v1327, %v1341
    %v1396 = vmul.f32 %v1328, %v1341
    %v1397 = vmul.f32 %v1329, %v1341
    %v1398 = vmul.f32 %v1330, %v1341
    %v1399 = vmul.f32 %v1331, %v1341
    %v1400 = vmul.f32 %v1332, %v1341
    %v1401 = vmul.f32 %v1333, %v1341
    %v1402 = vmul.f32 %v1334, %v1341
    %v1403 = vmul.f32 %v1335, %v1341
    %v1404 = vmul.f32 %v1336, %v1341
    %v1405 = vmul.f32 %v1337, %v1341
    %v1406 = vmul.f32 %v1338, %v1341
    %v1407 = vld [vmem:[%s3] sm:$0x1]
    %v1409 = vperm.slane %v1407, 0
    %v1411 = vadd.f32 %v1343, %v1409
    %v1412 = vadd.f32 %v1344, %v1409
    %v1413 = vadd.f32 %v1345, %v1409
    %v1414 = vadd.f32 %v1346, %v1409
    %v1415 = vadd.f32 %v1347, %v1409
    %v1416 = vadd.f32 %v1348, %v1409
    %v1417 = vadd.f32 %v1349, %v1409
    %v1418 = vadd.f32 %v1350, %v1409
    %v1419 = vadd.f32 %v1351, %v1409
    %v1420 = vadd.f32 %v1352, %v1409
    %v1421 = vadd.f32 %v1353, %v1409
    %v1422 = vadd.f32 %v1354, %v1409
    %v1423 = vadd.f32 %v1355, %v1409
    %v1424 = vadd.f32 %v1356, %v1409
    %v1425 = vadd.f32 %v1357, %v1409
    %v1426 = vadd.f32 %v1358, %v1409
    %v1427 = vadd.f32 %v1359, %v1409
    %v1428 = vadd.f32 %v1360, %v1409
    %v1429 = vadd.f32 %v1361, %v1409
    %v1430 = vadd.f32 %v1362, %v1409
    %v1431 = vadd.f32 %v1363, %v1409
    %v1432 = vadd.f32 %v1364, %v1409
    %v1433 = vadd.f32 %v1365, %v1409
    %v1434 = vadd.f32 %v1366, %v1409
    %v1435 = vadd.f32 %v1367, %v1409
    %v1436 = vadd.f32 %v1368, %v1409
    %v1437 = vadd.f32 %v1369, %v1409
    %v1438 = vadd.f32 %v1370, %v1409
    %v1439 = vadd.f32 %v1371, %v1409
    %v1440 = vadd.f32 %v1372, %v1409
    %v1441 = vadd.f32 %v1373, %v1409
    %v1442 = vadd.f32 %v1374, %v1409
    %v1443 = vadd.f32 %v1375, %v1409
    %v1444 = vadd.f32 %v1376, %v1409
    %v1445 = vadd.f32 %v1377, %v1409
    %v1446 = vadd.f32 %v1378, %v1409
    %v1447 = vadd.f32 %v1379, %v1409
    %v1448 = vadd.f32 %v1380, %v1409
    %v1449 = vadd.f32 %v1381, %v1409
    %v1450 = vadd.f32 %v1382, %v1409
    %v1451 = vadd.f32 %v1383, %v1409
    %v1452 = vadd.f32 %v1384, %v1409
    %v1453 = vadd.f32 %v1385, %v1409
    %v1454 = vadd.f32 %v1386, %v1409
    %v1455 = vadd.f32 %v1387, %v1409
    %v1456 = vadd.f32 %v1388, %v1409
    %v1457 = vadd.f32 %v1389, %v1409
    %v1458 = vadd.f32 %v1390, %v1409
    %v1459 = vadd.f32 %v1391, %v1409
    %v1460 = vadd.f32 %v1392, %v1409
    %v1461 = vadd.f32 %v1393, %v1409
    %v1462 = vadd.f32 %v1394, %v1409
    %v1463 = vadd.f32 %v1395, %v1409
    %v1464 = vadd.f32 %v1396, %v1409
    %v1465 = vadd.f32 %v1397, %v1409
    %v1466 = vadd.f32 %v1398, %v1409
    %v1467 = vadd.f32 %v1399, %v1409
    %v1468 = vadd.f32 %v1400, %v1409
    %v1469 = vadd.f32 %v1401, %v1409
    %v1470 = vadd.f32 %v1402, %v1409
    %v1471 = vadd.f32 %v1403, %v1409
    %v1472 = vadd.f32 %v1404, %v1409
    %v1473 = vadd.f32 %v1405, %v1409
    %v1474 = vadd.f32 %v1406, %v1409
    %v1475 = vmax.f32 %v1411, 0.0
    %v1476 = vmax.f32 %v1412, 0.0
    %v1477 = vmax.f32 %v1413, 0.0
    %v1478 = vmax.f32 %v1414, 0.0
    %v1479 = vmax.f32 %v1415, 0.0
    %v1480 = vmax.f32 %v1416, 0.0
    %v1481 = vmax.f32 %v1417, 0.0
    %v1482 = vmax.f32 %v1418, 0.0
    %v1483 = vmax.f32 %v1419, 0.0
    %v1484 = vmax.f32 %v1420, 0.0
    %v1485 = vmax.f32 %v1421, 0.0
    %v1486 = vmax.f32 %v1422, 0.0
    %v1487 = vmax.f32 %v1423, 0.0
    %v1488 = vmax.f32 %v1424, 0.0
    %v1489 = vmax.f32 %v1425, 0.0
    %v1490 = vmax.f32 %v1426, 0.0
    %v1491 = vmax.f32 %v1427, 0.0
    %v1492 = vmax.f32 %v1428, 0.0
    %v1493 = vmax.f32 %v1429, 0.0
    %v1494 = vmax.f32 %v1430, 0.0
    %v1495 = vmax.f32 %v1431, 0.0
    %v1496 = vmax.f32 %v1432, 0.0
    %v1497 = vmax.f32 %v1433, 0.0
    %v1498 = vmax.f32 %v1434, 0.0
    %v1499 = vmax.f32 %v1435, 0.0
    %v1500 = vmax.f32 %v1436, 0.0
    %v1501 = vmax.f32 %v1437, 0.0
    %v1502 = vmax.f32 %v1438, 0.0
    %v1503 = vmax.f32 %v1439, 0.0
    %v1504 = vmax.f32 %v1440, 0.0
    %v1505 = vmax.f32 %v1441, 0.0
    %v1506 = vmax.f32 %v1442, 0.0
    %v1507 = vmax.f32 %v1443, 0.0
    %v1508 = vmax.f32 %v1444, 0.0
    %v1509 = vmax.f32 %v1445, 0.0
    %v1510 = vmax.f32 %v1446, 0.0
    %v1511 = vmax.f32 %v1447, 0.0
    %v1512 = vmax.f32 %v1448, 0.0
    %v1513 = vmax.f32 %v1449, 0.0
    %v1514 = vmax.f32 %v1450, 0.0
    %v1515 = vmax.f32 %v1451, 0.0
    %v1516 = vmax.f32 %v1452, 0.0
    %v1517 = vmax.f32 %v1453, 0.0
    %v1518 = vmax.f32 %v1454, 0.0
    %v1519 = vmax.f32 %v1455, 0.0
    %v1520 = vmax.f32 %v1456, 0.0
    %v1521 = vmax.f32 %v1457, 0.0
    %v1522 = vmax.f32 %v1458, 0.0
    %v1523 = vmax.f32 %v1459, 0.0
    %v1524 = vmax.f32 %v1460, 0.0
    %v1525 = vmax.f32 %v1461, 0.0
    %v1526 = vmax.f32 %v1462, 0.0
    %v1527 = vmax.f32 %v1463, 0.0
    %v1528 = vmax.f32 %v1464, 0.0
    %v1529 = vmax.f32 %v1465, 0.0
    %v1530 = vmax.f32 %v1466, 0.0
    %v1531 = vmax.f32 %v1467, 0.0
    %v1532 = vmax.f32 %v1468, 0.0
    %v1533 = vmax.f32 %v1469, 0.0
    %v1534 = vmax.f32 %v1470, 0.0
    %v1535 = vmax.f32 %v1471, 0.0
    %v1536 = vmax.f32 %v1472, 0.0
    %v1537 = vmax.f32 %v1473, 0.0
    %v1538 = vmax.f32 %v1474, 0.0
    %1539 = vst.msk [vmem:[%s4] sm:$0xff] %vm727, %v1475
    %1540 = vst.msk [vmem:[%s4 + $0x8] sm:$0xff] %vm727, %v1476
    %1541 = vst.msk [vmem:[%s4 + $0x10] sm:$0xff] %vm727, %v1477
    %1542 = vst.msk [vmem:[%s4 + $0x18] sm:$0xff] %vm727, %v1478
    %1543 = vst.msk [vmem:[%s4 + $0x20] sm:$0xff] %vm727, %v1479
    %1544 = vst.msk [vmem:[%s4 + $0x28] sm:$0xff] %vm727, %v1480
    %1545 = vst.msk [vmem:[%s4 + $0x30] sm:$0xff] %vm727, %v1481
    %1546 = vst.msk [vmem:[%s4 + $0x38] sm:$0xff] %vm727, %v1482
    %1547 = vst.msk [vmem:[%s4 + $0x40] sm:$0xff] %vm727, %v1483
    %1548 = vst.msk [vmem:[%s4 + $0x48] sm:$0xff] %vm727, %v1484
    %1549 = vst.msk [vmem:[%s4 + $0x50] sm:$0xff] %vm727, %v1485
    %1550 = vst.msk [vmem:[%s4 + $0x58] sm:$0xff] %vm727, %v1486
    %1551 = vst.msk [vmem:[%s4 + $0x60] sm:$0xff] %vm727, %v1487
    %1552 = vst.msk [vmem:[%s4 + $0x68] sm:$0xff] %vm727, %v1488
    %1553 = vst.msk [vmem:[%s4 + $0x70] sm:$0xff] %vm727, %v1489
    %1554 = vst.msk [vmem:[%s4 + $0x78] sm:$0xff] %vm727, %v1490
    %1555 = vst.msk [vmem:[%s4 + $0x80] sm:$0xff] %vm727, %v1491
    %1556 = vst.msk [vmem:[%s4 + $0x88] sm:$0xff] %vm727, %v1492
    %1557 = vst.msk [vmem:[%s4 + $0x90] sm:$0xff] %vm727, %v1493
    %1558 = vst.msk [vmem:[%s4 + $0x98] sm:$0xff] %vm727, %v1494
    %1559 = vst.msk [vmem:[%s4 + $0xa0] sm:$0xff] %vm727, %v1495
    %1560 = vst.msk [vmem:[%s4 + $0xa8] sm:$0xff] %vm727, %v1496
    %1561 = vst.msk [vmem:[%s4 + $0xb0] sm:$0xff] %vm727, %v1497
    %1562 = vst.msk [vmem:[%s4 + $0xb8] sm:$0xff] %vm727, %v1498
    %1563 = vst.msk [vmem:[%s4 + $0xc0] sm:$0xff] %vm727, %v1499
    %1564 = vst.msk [vmem:[%s4 + $0xc8] sm:$0xff] %vm727, %v1500
    %1565 = vst.msk [vmem:[%s4 + $0xd0] sm:$0xff] %vm727, %v1501
    %1566 = vst.msk [vmem:[%s4 + $0xd8] sm:$0xff] %vm727, %v1502
    %1567 = vst.msk [vmem:[%s4 + $0xe0] sm:$0xff] %vm727, %v1503
    %1568 = vst.msk [vmem:[%s4 + $0xe8] sm:$0xff] %vm727, %v1504
    %1569 = vst.msk [vmem:[%s4 + $0xf0] sm:$0xff] %vm727, %v1505
    %1570 = vst.msk [vmem:[%s4 + $0xf8] sm:$0xff] %vm727, %v1506
    %1571 = vst.msk [vmem:[%s4 + $0x100] sm:$0xff] %vm727, %v1507
    %1572 = vst.msk [vmem:[%s4 + $0x108] sm:$0xff] %vm727, %v1508
    %1573 = vst.msk [vmem:[%s4 + $0x110] sm:$0xff] %vm727, %v1509
    %1574 = vst.msk [vmem:[%s4 + $0x118] sm:$0xff] %vm727, %v1510
    %1575 = vst.msk [vmem:[%s4 + $0x120] sm:$0xff] %vm727, %v1511
    %1576 = vst.msk [vmem:[%s4 + $0x128] sm:$0xff] %vm727, %v1512
    %1577 = vst.msk [vmem:[%s4 + $0x130] sm:$0xff] %vm727, %v1513
    %1578 = vst.msk [vmem:[%s4 + $0x138] sm:$0xff] %vm727, %v1514
    %1579 = vst.msk [vmem:[%s4 + $0x140] sm:$0xff] %vm727, %v1515
    %1580 = vst.msk [vmem:[%s4 + $0x148] sm:$0xff] %vm727, %v1516
    %1581 = vst.msk [vmem:[%s4 + $0x150] sm:$0xff] %vm727, %v1517
    %1582 = vst.msk [vmem:[%s4 + $0x158] sm:$0xff] %vm727, %v1518
    %1583 = vst.msk [vmem:[%s4 + $0x160] sm:$0xff] %vm727, %v1519
    %1584 = vst.msk [vmem:[%s4 + $0x168] sm:$0xff] %vm727, %v1520
    %1585 = vst.msk [vmem:[%s4 + $0x170] sm:$0xff] %vm727, %v1521
    %1586 = vst.msk [vmem:[%s4 + $0x178] sm:$0xff] %vm727, %v1522
    %1587 = vst.msk [vmem:[%s4 + $0x180] sm:$0xff] %vm727, %v1523
    %1588 = vst.msk [vmem:[%s4 + $0x188] sm:$0xff] %vm727, %v1524
    %1589 = vst.msk [vmem:[%s4 + $0x190] sm:$0xff] %vm727, %v1525
    %1590 = vst.msk [vmem:[%s4 + $0x198] sm:$0xff] %vm727, %v1526
    %1591 = vst.msk [vmem:[%s4 + $0x1a0] sm:$0xff] %vm727, %v1527
    %1592 = vst.msk [vmem:[%s4 + $0x1a8] sm:$0xff] %vm727, %v1528
    %1593 = vst.msk [vmem:[%s4 + $0x1b0] sm:$0xff] %vm727, %v1529
    %1594 = vst.msk [vmem:[%s4 + $0x1b8] sm:$0xff] %vm727, %v1530
    %1595 = vst.msk [vmem:[%s4 + $0x1c0] sm:$0xff] %vm727, %v1531
    %1596 = vst.msk [vmem:[%s4 + $0x1c8] sm:$0xff] %vm727, %v1532
    %1597 = vst.msk [vmem:[%s4 + $0x1d0] sm:$0xff] %vm727, %v1533
    %1598 = vst.msk [vmem:[%s4 + $0x1d8] sm:$0xff] %vm727, %v1534
    %1599 = vst.msk [vmem:[%s4 + $0x1e0] sm:$0xff] %vm727, %v1535
    %1600 = vst.msk [vmem:[%s4 + $0x1e8] sm:$0xff] %vm727, %v1536
    %1601 = vst.msk [vmem:[%s4 + $0x1f0] sm:$0xff] %vm727, %v1537
    %1602 = vst.msk [vmem:[%s4 + $0x1f8] sm:$0xff] %vm727, %v1538
  $region25: #{tpu_custom_call.1} parent=0 // pred_fallthru
    _
  // Predicated region
  $region26: #{tpu_custom_call.1} parent=0 // pred_check
    _
  $region27: #{tpu_custom_call.1} parent=0 // pred_check_branch
    %1604 = sbr.rel (0) target = $region29
  $region28: #{tpu_custom_call.1} parent=0 // pred_region
    _
  $region29: #{tpu_custom_call.1} parent=0 // pred_fallthru
    _
  // Predicated region
  $region30: #{tpu_custom_call.1} parent=0 // pred_check
    _
  $region31: #{tpu_custom_call.1} parent=0 // pred_check_branch
    %1606 = sbr.rel (0) target = $region33
  $region32: #{tpu_custom_call.1} parent=0 // pred_region
    _
  $region33: #{tpu_custom_call.1} parent=0 // pred_fallthru
    _

</llo_original>
